<compile_context>
chip_gen: v7x
topology: tpu7x:2x2x1
jax: 0.10.0
libtpu: 0.0.40
codegen_flags: <defaults>
</compile_context>

<pallas_src>
import jax
import jax.numpy as jnp
from jax.experimental import pallas as pl
from jax.experimental.pallas import tpu as pltpu

_LANE = 128
_MAX_RESIDENT_K = 2048             # above this, stream W1 over a K grid axis
_K_TILE_MAX = 2048                 # preferred K tile for the streamed path
_DMA_TILE_BYTES = 4 * 1024 * 1024  # per-view input tile target (HBM roofline sweet spot)
_MAX_TILE_ROWS = 2048


def _round_up(x, m):
    return (x + m - 1) // m * m


def _round_down8(x):
    return max(8, (x // 8) * 8)


def _vmem_capacity_bytes():
    """Physical VMEM of the attached TPU (64 MiB/TC on v7x, 128 MiB on v5e/v6e)."""
    try:
        cap = getattr(pltpu.get_tpu_info(), "vmem_capacity_bytes", None)
        if cap:
            return int(cap)
    except Exception:
        pass
    return 64 * 1024 * 1024  # conservative default (v7x per-TensorCore VMEM)


def _scoped_vmem_limit():
    # ~48 MiB on v7x; capped at 100 MiB on the 128-MiB generations (v5e/v6e).
    return min(int(0.75 * _vmem_capacity_bytes()), 100 * 1024 * 1024)


def _pick_tile_n(n, per_row_bytes, fixed_bytes, vmem_budget, dma_row_bytes):
    """Rows per batch tile.

    per_row_bytes : VMEM bytes per batch row, incl. double buffering of the
                    inputs/output and any per-row scratch.
    fixed_bytes   : row-independent VMEM (double-buffered weights / biases).
    dma_row_bytes : bytes per row of ONE view's input tile (largest per-step DMA).
    """
    if n <= 8:
        return n
    # >= 4 grid steps: both v7x TensorCores get work and the pipeline has depth.
    cap = min(_MAX_TILE_ROWS, max(8, _round_up(pl.cdiv(n, 4), 8)))
    # Keep each per-view input DMA around the 2-4 MiB roofline sweet spot.
    cap = min(cap, _round_down8(_DMA_TILE_BYTES // max(dma_row_bytes, 1)))
    # Whole double-buffered footprint must fit the scoped-VMEM budget.
    avail = vmem_budget - fixed_bytes - (2 << 20)   # 2 MiB headroom
    cap = min(cap, _round_down8(avail // max(per_row_bytes, 1)))
    return min(n, cap)


def _pick_tile_k(k_dim, max_tk=_K_TILE_MAX):
    """K tile for the streamed path; prefer an exact divisor (no pad copy)."""
    for tk in range(max_tk, 1023, -_LANE):
        if k_dim % tk == 0:
            return tk, k_dim
    return max_tk, _round_up(k_dim, max_tk)   # fallback: zero-pad K


# ---------------------------------------------------------------------------
# Pallas kernels
# ---------------------------------------------------------------------------

def _mlp_pair_kernel(x1_ref, x2_ref, w1_ref, b1_ref, w2_ref, b2_ref, o_ref):
    """Two-view 2-layer MLP, whole contraction dim resident in VMEM.

    x*: (TN, K) | w1: (K, H) bf16 | b1: (1, H) f32 | w2: (H, Fp) bf16
    b2: (1, Fp) f32 | o: (TN, 2*Fp) -- view 1 in lanes [:Fp], view 2 in [Fp:].
    """
    w1 = w1_ref[...]
    b1 = b1_ref[...]
    w2 = w2_ref[...]
    b2 = b2_ref[...]
    f_pad = o_ref.shape[1] // 2

    def mlp(x):
        # astype is a no-op when the caller already supplies bf16 activations.
        h = jnp.dot(x.astype(jnp.bfloat16), w1,
                    preferred_element_type=jnp.float32) + b1
        h = jnp.maximum(h, 0.0)
        return jnp.dot(h.astype(jnp.bfloat16), w2,
                       preferred_element_type=jnp.float32) + b2

    o_ref[:, :f_pad] = mlp(x1_ref[...]).astype(o_ref.dtype)
    o_ref[:, f_pad:] = mlp(x2_ref[...]).astype(o_ref.dtype)


def _mlp_pair_ktiled_kernel(x1_ref, x2_ref, w1_ref, b1_ref, w2_ref, b2_ref,
                            o_ref, h1_acc, h2_acc):
    """Two-view 2-layer MLP; layer-1 contraction streamed over grid axis 1."""
    k_idx = pl.program_id(1)

    @pl.when(k_idx == 0)
    def _():
        h1_acc[...] = jnp.zeros_like(h1_acc)
        h2_acc[...] = jnp.zeros_like(h2_acc)

    w1 = w1_ref[...]
    h1_acc[...] += jnp.dot(x1_ref[...].astype(jnp.bfloat16), w1,
                           preferred_element_type=jnp.float32)
    h2_acc[...] += jnp.dot(x2_ref[...].astype(jnp.bfloat16), w1,
                           preferred_element_type=jnp.float32)

    @pl.when(k_idx == pl.num_programs(1) - 1)
    def _():
        b1 = b1_ref[...]
        w2 = w2_ref[...]
        b2 = b2_ref[...]
        f_pad = o_ref.shape[1] // 2

        def head(h):
            h = jnp.maximum(h + b1, 0.0)
            return jnp.dot(h.astype(jnp.bfloat16), w2,
                           preferred_element_type=jnp.float32) + b2

        o_ref[:, :f_pad] = head(h1_acc[...]).astype(o_ref.dtype)
        o_ref[:, f_pad:] = head(h2_acc[...]).astype(o_ref.dtype)


# ---------------------------------------------------------------------------
# Wrappers
# ---------------------------------------------------------------------------

def _encode_pair_2d(x1, x2, params, *, out_dtype=jnp.bfloat16):
    """Both views through the shared 2-layer MLP in ONE pallas_call.

    x1, x2 : (N, Kin)  float32 or bfloat16
    params : (w1 (Kin, H), b1 (1, H), w2 (H, F), b2 (1, F))
    returns: (N, 2, F) in out_dtype.
    """
    n, k_dim = x1.shape
    w1, b1, w2, b2 = params
    hid = w1.shape[1]
    feat_dim = w2.shape[1]
    f_pad = _round_up(feat_dim, _LANE)

    w1 = w1.astype(jnp.bfloat16)
    b1 = b1.reshape(1, hid).astype(jnp.float32)
    w2p = jnp.pad(w2, ((0, 0), (0, f_pad - feat_dim))).astype(jnp.bfloat16)
    b2p = jnp.pad(b2.reshape(1, feat_dim),
                  ((0, 0), (0, f_pad - feat_dim))).astype(jnp.float32)

    in_bytes = x1.dtype.itemsize
    out_bytes = jnp.dtype(out_dtype).itemsize
    vmem_limit = _scoped_vmem_limit()

    # TODO(synk): pipeline_mode=pl.Buffered(1) on the constant-index weight
    # specs would reclaim their second VMEM buffer; the budgets below count
    # them double-buffered so the tiling stays safe without it.
    weight_bytes = 2 * (hid * 4 + hid * f_pad * 2 + f_pad * 4)

    if k_dim <= _MAX_RESIDENT_K:
        # -- Whole-K path: W1 stays resident in VMEM across all grid steps. --
        fixed = weight_bytes + 2 * k_dim * hid * 2
        per_row = 4 * k_dim * in_bytes + 4 * f_pad * out_bytes
        tn = _pick_tile_n(n, per_row, fixed, vmem_limit, k_dim * in_bytes)
        grid = (pl.cdiv(n, tn),)

        cost = pl.CostEstimate(
            flops=2 * 2 * n * (k_dim * hid + hid * f_pad),
            transcendentals=0,
            bytes_accessed=(2 * n * k_dim * in_bytes + k_dim * hid * 2
                            + hid * 4 + hid * f_pad * 2 + f_pad * 4
                            + n * 2 * f_pad * out_bytes))

        out = pl.pallas_call(
            _mlp_pair_kernel,
            out_shape=jax.ShapeDtypeStruct((n, 2 * f_pad), out_dtype),
            grid_spec=pltpu.PrefetchScalarGridSpec(
                num_scalar_prefetch=0,
                grid=grid,
                in_specs=[
                    pl.BlockSpec((tn, k_dim), lambda i: (i, 0)),
                    pl.BlockSpec((tn, k_dim), lambda i: (i, 0)),
                    pl.BlockSpec((k_dim, hid), lambda i: (0, 0)),
                    pl.BlockSpec((1, hid), lambda i: (0, 0)),
                    pl.BlockSpec((hid, f_pad), lambda i: (0, 0)),
                    pl.BlockSpec((1, f_pad), lambda i: (0, 0)),
                ],
                out_specs=pl.BlockSpec((tn, 2 * f_pad), lambda i: (i, 0)),
            ),
            compiler_params=pltpu.CompilerParams(
                dimension_semantics=("parallel",),
                vmem_limit_bytes=vmem_limit,
            ),
            cost_estimate=cost,
        )(x1, x2, w1, b1, w2p, b2p)
    else:
        # -- Streamed-K path: layer-1 contraction over a trailing "arbitrary"
        #    grid axis (full waveforms / large C*H*W). --
        tk, k_pad = _pick_tile_k(k_dim)
        if k_pad != k_dim:
            x1 = jnp.pad(x1, ((0, 0), (0, k_pad - k_dim)))
            x2 = jnp.pad(x2, ((0, 0), (0, k_pad - k_dim)))
            w1 = jnp.pad(w1, ((0, k_pad - k_dim), (0, 0)))
        nk = k_pad // tk

        fixed = weight_bytes + 2 * tk * hid * 2
        per_row = 4 * tk * in_bytes + 4 * f_pad * out_bytes + 2 * hid * 4
        tn = _pick_tile_n(n, per_row, fixed, vmem_limit, tk * in_bytes)
        grid = (pl.cdiv(n, tn), nk)

        cost = pl.CostEstimate(
            flops=2 * 2 * n * (k_pad * hid + hid * f_pad),
            transcendentals=0,
            bytes_accessed=(2 * n * k_pad * in_bytes
                            + pl.cdiv(n, tn) * k_pad * hid * 2
                            + hid * 4 + hid * f_pad * 2 + f_pad * 4
                            + n * 2 * f_pad * out_bytes))

        out = pl.pallas_call(
            _mlp_pair_ktiled_kernel,
            out_shape=jax.ShapeDtypeStruct((n, 2 * f_pad), out_dtype),
            grid_spec=pltpu.PrefetchScalarGridSpec(
                num_scalar_prefetch=0,
                grid=grid,
                in_specs=[
                    pl.BlockSpec((tn, tk), lambda i, j: (i, j)),
                    pl.BlockSpec((tn, tk), lambda i, j: (i, j)),
                    pl.BlockSpec((tk, hid), lambda i, j: (j, 0)),
                    pl.BlockSpec((1, hid), lambda i, j: (0, 0)),
                    pl.BlockSpec((hid, f_pad), lambda i, j: (0, 0)),
                    pl.BlockSpec((1, f_pad), lambda i, j: (0, 0)),
                ],
                out_specs=pl.BlockSpec((tn, 2 * f_pad), lambda i, j: (i, 0)),
                scratch_shapes=[pltpu.VMEM((tn, hid), jnp.float32),
                                pltpu.VMEM((tn, hid), jnp.float32)],
            ),
            compiler_params=pltpu.CompilerParams(
                dimension_semantics=("parallel", "arbitrary"),
                vmem_limit_bytes=vmem_limit,
            ),
            cost_estimate=cost,
        )(x1, x2, w1, b1, w2p, b2p)

    out = out.reshape(n, 2, f_pad)            # free contiguous reshape
    if f_pad != feat_dim:
        out = out[:, :, :feat_dim]
    return out


def audio_encode_pair(audio_1, audio_2, params, *, out_dtype=jnp.bfloat16):
    """audio_*: (N, K) -> (N, 2, feat_dim)."""
    return _encode_pair_2d(audio_1, audio_2, params, out_dtype=out_dtype)


def vision_encode_pair(img_1, img_2, params, *, out_dtype=jnp.bfloat16):
    """img_*: (N, C, H, W) -> (N, 2, feat_dim).

    Global-average-pool folded into layer 1:
        mean_s(x[n, c, s]) @ W1  ==  x.reshape(N, C*HW) @ repeat(W1 / HW, HW, axis=0)
    so the input DMA is a lane-dense 2D tile (no (tn, C, HW) sublane padding)
    and the XLU reduce disappears into the (already HBM-bound) MXU matmul.
    """
    n, c, h, w = img_1.shape
    hw = h * w
    w1, b1, w2, b2 = params
    w1_pool = jnp.repeat(w1 / hw, hw, axis=0)        # (C*HW, hid)
    x1 = img_1.reshape(n, c * hw)                    # contiguous reshape, no transpose
    x2 = img_2.reshape(n, c * hw)
    return _encode_pair_2d(x1, x2, (w1_pool, b1, w2, b2), out_dtype=out_dtype)


def av_encoder_forward(audio_1, audio_2, img_1, img_2, aud_params, img_params,
                       out_dtype=jnp.bfloat16):
    feat_aud = audio_encode_pair(audio_1, audio_2, aud_params, out_dtype=out_dtype)
    feat_img = vision_encode_pair(img_1, img_2, img_params, out_dtype=out_dtype)
    return {"aud": feat_aud, "img": feat_img}


# ---------------------------------------------------------------------------
# Deterministic parameter init + demo
# ---------------------------------------------------------------------------

def init_params(key, in_dim, hidden, feat_dim):
    k1, k2 = jax.random.split(key)
    w1 = jax.random.normal(k1, (in_dim, hidden), jnp.float32) * (1.0 / jnp.sqrt(in_dim))
    b1 = jnp.zeros((1, hidden), jnp.float32)
    w2 = jax.random.normal(k2, (hidden, feat_dim), jnp.float32) * (1.0 / jnp.sqrt(hidden))
    b2 = jnp.zeros((1, feat_dim), jnp.float32)
    return (w1, b1, w2, b2)


if __name__ == "__main__":
    # Small shapes consistent with the module's forward signature.
    N, K = 2, 256            # audio: (N, K)
    C, H, W = 4, 16, 16      # image: (N, C, H, W)
    HIDDEN, FEAT_DIM = 32, 32

    key = jax.random.PRNGKey(0)
    k_a1, k_a2, k_i1, k_i2, k_pa, k_pv, k_big = jax.random.split(key, 7)

    audio_1 = jax.random.normal(k_a1, (N, K), jnp.float32)
    audio_2 = jax.random.normal(k_a2, (N, K), jnp.float32)
    img_1 = jax.random.normal(k_i1, (N, C, H, W), jnp.float32)
    img_2 = jax.random.normal(k_i2, (N, C, H, W), jnp.float32)

    aud_params = init_params(k_pa, K, HIDDEN, FEAT_DIM)
    img_params = init_params(k_pv, C, HIDDEN, FEAT_DIM)

    fwd = jax.jit(av_encoder_forward)
    out = fwd(audio_1, audio_2, img_1, img_2, aud_params, img_params)
    jax.block_until_ready(out)

    assert out["aud"].shape == (N, 2, FEAT_DIM), out["aud"].shape
    assert out["img"].shape == (N, 2, FEAT_DIM), out["img"].shape

    # Pure-JAX reference emulating the bf16-operand / f32-accumulate MXU path.
    def ref_mlp(x, p):
        w1, b1, w2, b2 = p
        h = jnp.dot(x.astype(jnp.bfloat16), w1.astype(jnp.bfloat16),
                    preferred_element_type=jnp.float32) + b1
        h = jnp.maximum(h, 0.0)
        return jnp.dot(h.astype(jnp.bfloat16), w2.astype(jnp.bfloat16),
                       preferred_element_type=jnp.float32) + b2

    def ref_vision(x, p):
        return ref_mlp(jnp.mean(x, axis=(2, 3)), p)

    ref_aud = jnp.stack([ref_mlp(audio_1, aud_params),
                         ref_mlp(audio_2, aud_params)], axis=1)
    ref_img = jnp.stack([ref_vision(img_1, img_params),
                         ref_vision(img_2, img_params)], axis=1)

    err_aud = jnp.max(jnp.abs(out["aud"].astype(jnp.float32) - ref_aud))
    err_img = jnp.max(jnp.abs(out["img"].astype(jnp.float32) - ref_img))
    assert jnp.allclose(out["aud"].astype(jnp.float32), ref_aud,
                        atol=3e-2, rtol=3e-2), err_aud
    assert jnp.allclose(out["img"].astype(jnp.float32), ref_img,
                        atol=3e-2, rtol=3e-2), err_img

    # Exercise the streamed-K path (full-waveform-sized audio, K > 2048).
    K_BIG = 4096
    kb1, kb2, kbp = jax.random.split(k_big, 3)
    big_a1 = jax.random.normal(kb1, (N, K_BIG), jnp.float32)
    big_a2 = jax.random.normal(kb2, (N, K_BIG), jnp.float32)
    big_params = init_params(kbp, K_BIG, HIDDEN, FEAT_DIM)
    big_out = jax.jit(audio_encode_pair)(big_a1, big_a2, big_params)
    jax.block_until_ready(big_out)
    big_ref = jnp.stack([ref_mlp(big_a1, big_params),
                         ref_mlp(big_a2, big_params)], axis=1)
    err_big = jnp.max(jnp.abs(big_out.astype(jnp.float32) - big_ref))
    assert jnp.allclose(big_out.astype(jnp.float32), big_ref,
                        atol=3e-2, rtol=3e-2), err_big

    print("KERNEL_OK")
</pallas_src>

<mosaic_0001>
module attributes {stable_mosaic.version = 11 : i64} {
  func.func @_mlp_pair_kernel(%arg0: i32, %arg1: memref<2x1024xf32, #tpu.memory_space<vmem>>, %arg2: memref<2x1024xf32, #tpu.memory_space<vmem>>, %arg3: memref<1024x32xbf16, #tpu.memory_space<vmem>>, %arg4: memref<1x32xf32, #tpu.memory_space<vmem>>, %arg5: memref<32x128xbf16, #tpu.memory_space<vmem>>, %arg6: memref<1x128xf32, #tpu.memory_space<vmem>>, %arg7: memref<2x256xbf16, #tpu.memory_space<vmem>>) attributes {dimension_semantics = [#tpu.dimension_semantics<parallel>], iteration_bounds = array<i64: 1>, scalar_prefetch = 0 : i64, scratch_operands = 0 : i64, tpu.core_type = #tpu.core_type<tc>, window_params = [{transform_indices = @transform_0, window_bounds = array<i64: 2, 1024>}, {transform_indices = @transform_1, window_bounds = array<i64: 2, 1024>}, {pipeline_mode = #tpu.pipeline_mode<synchronous>, transform_indices = @transform_2, window_bounds = array<i64: 1024, 32>}, {pipeline_mode = #tpu.pipeline_mode<synchronous>, transform_indices = @transform_3, window_bounds = array<i64: 1, 32>}, {pipeline_mode = #tpu.pipeline_mode<synchronous>, transform_indices = @transform_4, window_bounds = array<i64: 32, 128>}, {pipeline_mode = #tpu.pipeline_mode<synchronous>, transform_indices = @transform_5, window_bounds = array<i64: 1, 128>}, {transform_indices = @transform_6, window_bounds = array<i64: 2, 256>}]} {
    %c0 = arith.constant 0 : index
    %c0_0 = arith.constant 0 : index
    %0 = vector.load %arg3[%c0, %c0_0] : memref<1024x32xbf16, #tpu.memory_space<vmem>>, vector<1024x32xbf16>
    %c0_1 = arith.constant 0 : index
    %c0_2 = arith.constant 0 : index
    %1 = vector.load %arg4[%c0_1, %c0_2] : memref<1x32xf32, #tpu.memory_space<vmem>>, vector<1x32xf32>
    %c0_3 = arith.constant 0 : index
    %c0_4 = arith.constant 0 : index
    %2 = vector.load %arg5[%c0_3, %c0_4] : memref<32x128xbf16, #tpu.memory_space<vmem>>, vector<32x128xbf16>
    %c0_5 = arith.constant 0 : index
    %c0_6 = arith.constant 0 : index
    %3 = vector.load %arg6[%c0_5, %c0_6] : memref<1x128xf32, #tpu.memory_space<vmem>>, vector<1x128xf32>
    %c0_7 = arith.constant 0 : index
    %c0_8 = arith.constant 0 : index
    %4 = vector.load %arg1[%c0_7, %c0_8] : memref<2x1024xf32, #tpu.memory_space<vmem>>, vector<2x1024xf32>
    %5 = arith.truncf %4 : vector<2x1024xf32> to vector<2x1024xbf16>
    %cst = arith.constant dense<0.000000e+00> : vector<2x32xf32>
    %6 = tpu.matmul %5, %0, %cst {dimension_numbers = #tpu.dot_dimension_numbers<[1], [0], [0], [1], [0, 0, 1, 1], [], []>} : vector<2x1024xbf16>, vector<1024x32xbf16>, vector<2x32xf32> -> vector<2x32xf32>
    %7 = vector.broadcast %1 : vector<1x32xf32> to vector<2x32xf32>
    %8 = arith.addf %6, %7 : vector<2x32xf32>
    %cst_9 = arith.constant 0.000000e+00 : f32
    %9 = vector.broadcast %cst_9 : f32 to vector<2x32xf32>
    %10 = arith.maximumf %8, %9 : vector<2x32xf32>
    %11 = arith.truncf %10 : vector<2x32xf32> to vector<2x32xbf16>
    %cst_10 = arith.constant dense<0.000000e+00> : vector<2x128xf32>
    %12 = tpu.matmul %11, %2, %cst_10 {dimension_numbers = #tpu.dot_dimension_numbers<[1], [0], [0], [1], [0, 0, 1, 1], [], []>} : vector<2x32xbf16>, vector<32x128xbf16>, vector<2x128xf32> -> vector<2x128xf32>
    %13 = vector.broadcast %3 : vector<1x128xf32> to vector<2x128xf32>
    %14 = arith.addf %12, %13 : vector<2x128xf32>
    %15 = arith.truncf %14 : vector<2x128xf32> to vector<2x128xbf16>
    %c0_11 = arith.constant 0 : index
    %c0_12 = arith.constant 0 : index
    %16 = vector.load %arg7[%c0_11, %c0_12] : memref<2x256xbf16, #tpu.memory_space<vmem>>, vector<2x128xbf16>
    tpu.vector_store %arg7[%c0_11, %c0_12], %15 {strides = array<i32>} : memref<2x256xbf16, #tpu.memory_space<vmem>>, vector<2x128xbf16>,
    %c0_13 = arith.constant 0 : index
    %c0_14 = arith.constant 0 : index
    %17 = vector.load %arg2[%c0_13, %c0_14] : memref<2x1024xf32, #tpu.memory_space<vmem>>, vector<2x1024xf32>
    %18 = arith.truncf %17 : vector<2x1024xf32> to vector<2x1024xbf16>
    %cst_15 = arith.constant dense<0.000000e+00> : vector<2x32xf32>
    %19 = tpu.matmul %18, %0, %cst_15 {dimension_numbers = #tpu.dot_dimension_numbers<[1], [0], [0], [1], [0, 0, 1, 1], [], []>} : vector<2x1024xbf16>, vector<1024x32xbf16>, vector<2x32xf32> -> vector<2x32xf32>
    %20 = vector.broadcast %1 : vector<1x32xf32> to vector<2x32xf32>
    %21 = arith.addf %19, %20 : vector<2x32xf32>
    %cst_16 = arith.constant 0.000000e+00 : f32
    %22 = vector.broadcast %cst_16 : f32 to vector<2x32xf32>
    %23 = arith.maximumf %21, %22 : vector<2x32xf32>
    %24 = arith.truncf %23 : vector<2x32xf32> to vector<2x32xbf16>
    %cst_17 = arith.constant dense<0.000000e+00> : vector<2x128xf32>
    %25 = tpu.matmul %24, %2, %cst_17 {dimension_numbers = #tpu.dot_dimension_numbers<[1], [0], [0], [1], [0, 0, 1, 1], [], []>} : vector<2x32xbf16>, vector<32x128xbf16>, vector<2x128xf32> -> vector<2x128xf32>
    %26 = vector.broadcast %3 : vector<1x128xf32> to vector<2x128xf32>
    %27 = arith.addf %25, %26 : vector<2x128xf32>
    %28 = arith.truncf %27 : vector<2x128xf32> to vector<2x128xbf16>
    %c0_18 = arith.constant 0 : index
    %c128 = arith.constant 128 : index
    %29 = vector.load %arg7[%c0_18, %c128] : memref<2x256xbf16, #tpu.memory_space<vmem>>, vector<2x128xbf16>
    tpu.vector_store %arg7[%c0_18, %c128], %28 {strides = array<i32>} : memref<2x256xbf16, #tpu.memory_space<vmem>>, vector<2x128xbf16>,
    return
  }
  func.func @transform_0(%arg0: i32) -> (i32, i32) {
    %c0_i32 = arith.constant 0 : i32
    %c0_i32_0 = arith.constant 0 : i32
    return %arg0, %c0_i32 : i32, i32
  }
  func.func @transform_1(%arg0: i32) -> (i32, i32) {
    %c0_i32 = arith.constant 0 : i32
    %c0_i32_0 = arith.constant 0 : i32
    return %arg0, %c0_i32 : i32, i32
  }
  func.func @transform_2(%arg0: i32) -> (i32, i32) {
    %c0_i32 = arith.constant 0 : i32
    %c0_i32_0 = arith.constant 0 : i32
    %c0_i32_1 = arith.constant 0 : i32
    return %c0_i32, %c0_i32_0 : i32, i32
  }
  func.func @transform_3(%arg0: i32) -> (i32, i32) {
    %c0_i32 = arith.constant 0 : i32
    %c0_i32_0 = arith.constant 0 : i32
    %c0_i32_1 = arith.constant 0 : i32
    return %c0_i32, %c0_i32_0 : i32, i32
  }
  func.func @transform_4(%arg0: i32) -> (i32, i32) {
    %c0_i32 = arith.constant 0 : i32
    %c0_i32_0 = arith.constant 0 : i32
    %c0_i32_1 = arith.constant 0 : i32
    return %c0_i32, %c0_i32_0 : i32, i32
  }
  func.func @transform_5(%arg0: i32) -> (i32, i32) {
    %c0_i32 = arith.constant 0 : i32
    %c0_i32_0 = arith.constant 0 : i32
    %c0_i32_1 = arith.constant 0 : i32
    return %c0_i32, %c0_i32_0 : i32, i32
  }
  func.func @transform_6(%arg0: i32) -> (i32, i32) {
    %c0_i32 = arith.constant 0 : i32
    %c0_i32_0 = arith.constant 0 : i32
    return %arg0, %c0_i32 : i32, i32
  }
}

module attributes {stable_mosaic.version = 11 : i64} {
  func.func @_mlp_pair_kernel(%arg0: i32, %arg1: memref<2x256xf32, #tpu.memory_space<vmem>>, %arg2: memref<2x256xf32, #tpu.memory_space<vmem>>, %arg3: memref<256x32xbf16, #tpu.memory_space<vmem>>, %arg4: memref<1x32xf32, #tpu.memory_space<vmem>>, %arg5: memref<32x128xbf16, #tpu.memory_space<vmem>>, %arg6: memref<1x128xf32, #tpu.memory_space<vmem>>, %arg7: memref<2x256xbf16, #tpu.memory_space<vmem>>) attributes {dimension_semantics = [#tpu.dimension_semantics<parallel>], iteration_bounds = array<i64: 1>, scalar_prefetch = 0 : i64, scratch_operands = 0 : i64, tpu.core_type = #tpu.core_type<tc>, window_params = [{transform_indices = @transform_0, window_bounds = array<i64: 2, 256>}, {transform_indices = @transform_1, window_bounds = array<i64: 2, 256>}, {pipeline_mode = #tpu.pipeline_mode<synchronous>, transform_indices = @transform_2, window_bounds = array<i64: 256, 32>}, {pipeline_mode = #tpu.pipeline_mode<synchronous>, transform_indices = @transform_3, window_bounds = array<i64: 1, 32>}, {pipeline_mode = #tpu.pipeline_mode<synchronous>, transform_indices = @transform_4, window_bounds = array<i64: 32, 128>}, {pipeline_mode = #tpu.pipeline_mode<synchronous>, transform_indices = @transform_5, window_bounds = array<i64: 1, 128>}, {transform_indices = @transform_6, window_bounds = array<i64: 2, 256>}]} {
    %c0 = arith.constant 0 : index
    %c0_0 = arith.constant 0 : index
    %0 = vector.load %arg3[%c0, %c0_0] : memref<256x32xbf16, #tpu.memory_space<vmem>>, vector<256x32xbf16>
    %c0_1 = arith.constant 0 : index
    %c0_2 = arith.constant 0 : index
    %1 = vector.load %arg4[%c0_1, %c0_2] : memref<1x32xf32, #tpu.memory_space<vmem>>, vector<1x32xf32>
    %c0_3 = arith.constant 0 : index
    %c0_4 = arith.constant 0 : index
    %2 = vector.load %arg5[%c0_3, %c0_4] : memref<32x128xbf16, #tpu.memory_space<vmem>>, vector<32x128xbf16>
    %c0_5 = arith.constant 0 : index
    %c0_6 = arith.constant 0 : index
    %3 = vector.load %arg6[%c0_5, %c0_6] : memref<1x128xf32, #tpu.memory_space<vmem>>, vector<1x128xf32>
    %c0_7 = arith.constant 0 : index
    %c0_8 = arith.constant 0 : index
    %4 = vector.load %arg1[%c0_7, %c0_8] : memref<2x256xf32, #tpu.memory_space<vmem>>, vector<2x256xf32>
    %5 = arith.truncf %4 : vector<2x256xf32> to vector<2x256xbf16>
    %cst = arith.constant dense<0.000000e+00> : vector<2x32xf32>
    %6 = tpu.matmul %5, %0, %cst {dimension_numbers = #tpu.dot_dimension_numbers<[1], [0], [0], [1], [0, 0, 1, 1], [], []>} : vector<2x256xbf16>, vector<256x32xbf16>, vector<2x32xf32> -> vector<2x32xf32>
    %7 = vector.broadcast %1 : vector<1x32xf32> to vector<2x32xf32>
    %8 = arith.addf %6, %7 : vector<2x32xf32>
    %cst_9 = arith.constant 0.000000e+00 : f32
    %9 = vector.broadcast %cst_9 : f32 to vector<2x32xf32>
    %10 = arith.maximumf %8, %9 : vector<2x32xf32>
    %11 = arith.truncf %10 : vector<2x32xf32> to vector<2x32xbf16>
    %cst_10 = arith.constant dense<0.000000e+00> : vector<2x128xf32>
    %12 = tpu.matmul %11, %2, %cst_10 {dimension_numbers = #tpu.dot_dimension_numbers<[1], [0], [0], [1], [0, 0, 1, 1], [], []>} : vector<2x32xbf16>, vector<32x128xbf16>, vector<2x128xf32> -> vector<2x128xf32>
    %13 = vector.broadcast %3 : vector<1x128xf32> to vector<2x128xf32>
    %14 = arith.addf %12, %13 : vector<2x128xf32>
    %15 = arith.truncf %14 : vector<2x128xf32> to vector<2x128xbf16>
    %c0_11 = arith.constant 0 : index
    %c0_12 = arith.constant 0 : index
    %16 = vector.load %arg7[%c0_11, %c0_12] : memref<2x256xbf16, #tpu.memory_space<vmem>>, vector<2x128xbf16>
    tpu.vector_store %arg7[%c0_11, %c0_12], %15 {strides = array<i32>} : memref<2x256xbf16, #tpu.memory_space<vmem>>, vector<2x128xbf16>,
    %c0_13 = arith.constant 0 : index
    %c0_14 = arith.constant 0 : index
    %17 = vector.load %arg2[%c0_13, %c0_14] : memref<2x256xf32, #tpu.memory_space<vmem>>, vector<2x256xf32>
    %18 = arith.truncf %17 : vector<2x256xf32> to vector<2x256xbf16>
    %cst_15 = arith.constant dense<0.000000e+00> : vector<2x32xf32>
    %19 = tpu.matmul %18, %0, %cst_15 {dimension_numbers = #tpu.dot_dimension_numbers<[1], [0], [0], [1], [0, 0, 1, 1], [], []>} : vector<2x256xbf16>, vector<256x32xbf16>, vector<2x32xf32> -> vector<2x32xf32>
    %20 = vector.broadcast %1 : vector<1x32xf32> to vector<2x32xf32>
    %21 = arith.addf %19, %20 : vector<2x32xf32>
    %cst_16 = arith.constant 0.000000e+00 : f32
    %22 = vector.broadcast %cst_16 : f32 to vector<2x32xf32>
    %23 = arith.maximumf %21, %22 : vector<2x32xf32>
    %24 = arith.truncf %23 : vector<2x32xf32> to vector<2x32xbf16>
    %cst_17 = arith.constant dense<0.000000e+00> : vector<2x128xf32>
    %25 = tpu.matmul %24, %2, %cst_17 {dimension_numbers = #tpu.dot_dimension_numbers<[1], [0], [0], [1], [0, 0, 1, 1], [], []>} : vector<2x32xbf16>, vector<32x128xbf16>, vector<2x128xf32> -> vector<2x128xf32>
    %26 = vector.broadcast %3 : vector<1x128xf32> to vector<2x128xf32>
    %27 = arith.addf %25, %26 : vector<2x128xf32>
    %28 = arith.truncf %27 : vector<2x128xf32> to vector<2x128xbf16>
    %c0_18 = arith.constant 0 : index
    %c128 = arith.constant 128 : index
    %29 = vector.load %arg7[%c0_18, %c128] : memref<2x256xbf16, #tpu.memory_space<vmem>>, vector<2x128xbf16>
    tpu.vector_store %arg7[%c0_18, %c128], %28 {strides = array<i32>} : memref<2x256xbf16, #tpu.memory_space<vmem>>, vector<2x128xbf16>,
    return
  }
  func.func @transform_0(%arg0: i32) -> (i32, i32) {
    %c0_i32 = arith.constant 0 : i32
    %c0_i32_0 = arith.constant 0 : i32
    return %arg0, %c0_i32 : i32, i32
  }
  func.func @transform_1(%arg0: i32) -> (i32, i32) {
    %c0_i32 = arith.constant 0 : i32
    %c0_i32_0 = arith.constant 0 : i32
    return %arg0, %c0_i32 : i32, i32
  }
  func.func @transform_2(%arg0: i32) -> (i32, i32) {
    %c0_i32 = arith.constant 0 : i32
    %c0_i32_0 = arith.constant 0 : i32
    %c0_i32_1 = arith.constant 0 : i32
    return %c0_i32, %c0_i32_0 : i32, i32
  }
  func.func @transform_3(%arg0: i32) -> (i32, i32) {
    %c0_i32 = arith.constant 0 : i32
    %c0_i32_0 = arith.constant 0 : i32
    %c0_i32_1 = arith.constant 0 : i32
    return %c0_i32, %c0_i32_0 : i32, i32
  }
  func.func @transform_4(%arg0: i32) -> (i32, i32) {
    %c0_i32 = arith.constant 0 : i32
    %c0_i32_0 = arith.constant 0 : i32
    %c0_i32_1 = arith.constant 0 : i32
    return %c0_i32, %c0_i32_0 : i32, i32
  }
  func.func @transform_5(%arg0: i32) -> (i32, i32) {
    %c0_i32 = arith.constant 0 : i32
    %c0_i32_0 = arith.constant 0 : i32
    %c0_i32_1 = arith.constant 0 : i32
    return %c0_i32, %c0_i32_0 : i32, i32
  }
  func.func @transform_6(%arg0: i32) -> (i32, i32) {
    %c0_i32 = arith.constant 0 : i32
    %c0_i32_0 = arith.constant 0 : i32
    return %arg0, %c0_i32 : i32, i32
  }
}

</mosaic_0001>

<llo_original>
// kernel: av_encoder_forward.2
$region0: #{av_encoder_forward.2}
  #allocation0 [shape = 'u32[]', space=smem, size = 0x4, offset = 0x4, fixed_abs, tag = 'smem constant byte address 0x4 - core index']
  #allocation1 [shape = 'u32[144,128]{1,0:T(1,128)}', space=vmem, size = 0x12000, scoped, tag = 'internal scratch']
  %s0 = inlined_call_operand.vmem [shape: f32[2,256], index: 0, kind: input, shape index: {}]
  %s1 = inlined_call_operand.vmem [shape: f32[2,256], index: 1, kind: input, shape index: {}]
  %s2 = inlined_call_operand.vmem [shape: bf16[256,32], index: 2, kind: input, shape index: {}]
  %s3 = inlined_call_operand.vmem [shape: f32[1,32], index: 3, kind: input, shape index: {}]
  %s4 = inlined_call_operand.vmem [shape: bf16[32,128], index: 4, kind: input, shape index: {}]
  %s5 = inlined_call_operand.vmem [shape: f32[1,128], index: 5, kind: input, shape index: {}]
  %s6 = inlined_call_operand.vmem [shape: bf16[2,256], index: 6, kind: output, shape index: {}]
  %s7 = sld [smem:[#allocation0]]
  $region34: #{av_encoder_forward.2} parent=0
    _
  %s9 = ssub.s32 1, %s7
  %s10 = scalar_select 0, %s9, %s7
  // Predicated region
  $region2: #{av_encoder_forward.2} parent=0 // pred_check
    _
  $region3: #{av_encoder_forward.2} parent=0 // pred_check_branch
    %12 = sbr.rel (0) target = $region5
  $region4: #{av_encoder_forward.2} parent=0 // pred_region
    _
  $region5: #{av_encoder_forward.2} parent=0 // pred_fallthru
    _
  // Predicated region
  $region6: #{av_encoder_forward.2} parent=0 // pred_check
    _
  $region7: #{av_encoder_forward.2} parent=0 // pred_check_branch
    %14 = sbr.rel (0) target = $region9
  $region8: #{av_encoder_forward.2} parent=0 // pred_region
    _
  $region9: #{av_encoder_forward.2} parent=0 // pred_fallthru
    _
  // Predicated region
  $region10: #{av_encoder_forward.2} parent=0 // pred_check
    _
  $region11: #{av_encoder_forward.2} parent=0 // pred_check_branch
    %16 = sbr.rel (0) target = $region13
  $region12: #{av_encoder_forward.2} parent=0 // pred_region
    _
  $region13: #{av_encoder_forward.2} parent=0 // pred_fallthru
    _
  // Predicated region
  $region14: #{av_encoder_forward.2} parent=0 // pred_check
    _
  $region15: #{av_encoder_forward.2} parent=0 // pred_check_branch
    %18 = sbr.rel (0) target = $region17
  $region16: #{av_encoder_forward.2} parent=0 // pred_region
    _
  $region17: #{av_encoder_forward.2} parent=0 // pred_fallthru
    _
  // Predicated region
  $region18: #{av_encoder_forward.2} parent=0 // pred_check
    _
  $region19: #{av_encoder_forward.2} parent=0 // pred_check_branch
    %20 = sbr.rel (0) target = $region21
  $region20: #{av_encoder_forward.2} parent=0 // pred_region
    _
  $region21: #{av_encoder_forward.2} parent=0 // pred_fallthru
    _
  // Predicated region
  $region22: #{av_encoder_forward.2} parent=0 // pred_check
    _
  $region23: #{av_encoder_forward.2} parent=0 // pred_check_branch
    %22 = sbr.rel (0) target = $region25
  $region24: #{av_encoder_forward.2} parent=0 // pred_region
    _
  $region25: #{av_encoder_forward.2} parent=0 // pred_fallthru
    _
  %v24 = vld [vmem:[%s2] sm:$0xf]
  %v25 = vld [vmem:[%s2 + $0x4] sm:$0xf]
  %v26 = vld [vmem:[%s2 + $0x8] sm:$0xf]
  %v27 = vld [vmem:[%s2 + $0xc] sm:$0xf]
  %v28 = vld [vmem:[%s2 + $0x10] sm:$0xf]
  %v29 = vld [vmem:[%s2 + $0x14] sm:$0xf]
  %v30 = vld [vmem:[%s2 + $0x18] sm:$0xf]
  %v31 = vld [vmem:[%s2 + $0x1c] sm:$0xf]
  %v32 = vld [vmem:[%s2 + $0x20] sm:$0xf]
  %v33 = vld [vmem:[%s2 + $0x24] sm:$0xf]
  %v34 = vld [vmem:[%s2 + $0x28] sm:$0xf]
  %v35 = vld [vmem:[%s2 + $0x2c] sm:$0xf]
  %v36 = vld [vmem:[%s2 + $0x30] sm:$0xf]
  %v37 = vld [vmem:[%s2 + $0x34] sm:$0xf]
  %v38 = vld [vmem:[%s2 + $0x38] sm:$0xf]
  %v39 = vld [vmem:[%s2 + $0x3c] sm:$0xf]
  %v40 = vld [vmem:[%s2 + $0x40] sm:$0xf]
  %v41 = vld [vmem:[%s2 + $0x44] sm:$0xf]
  %v42 = vld [vmem:[%s2 + $0x48] sm:$0xf]
  %v43 = vld [vmem:[%s2 + $0x4c] sm:$0xf]
  %v44 = vld [vmem:[%s2 + $0x50] sm:$0xf]
  %v45 = vld [vmem:[%s2 + $0x54] sm:$0xf]
  %v46 = vld [vmem:[%s2 + $0x58] sm:$0xf]
  %v47 = vld [vmem:[%s2 + $0x5c] sm:$0xf]
  %v48 = vld [vmem:[%s2 + $0x60] sm:$0xf]
  %v49 = vld [vmem:[%s2 + $0x64] sm:$0xf]
  %v50 = vld [vmem:[%s2 + $0x68] sm:$0xf]
  %v51 = vld [vmem:[%s2 + $0x6c] sm:$0xf]
  %v52 = vld [vmem:[%s2 + $0x70] sm:$0xf]
  %v53 = vld [vmem:[%s2 + $0x74] sm:$0xf]
  %v54 = vld [vmem:[%s2 + $0x78] sm:$0xf]
  %v55 = vld [vmem:[%s2 + $0x7c] sm:$0xf]
  %v56 = vld [vmem:[%s3] sm:$0x1]
  %v57 = vld [vmem:[%s4] sm:$0xf]
  %v58 = vld [vmem:[%s4 + $0x4] sm:$0xf]
  %v59 = vld [vmem:[%s4 + $0x8] sm:$0xf]
  %v60 = vld [vmem:[%s4 + $0xc] sm:$0xf]
  %v61 = vld [vmem:[%s5] sm:$0x1]
  %v62 = vld [vmem:[%s0] sm:$0xf]
  %v65 = vunpack.c.l.s4 1983009808
  %v66 = vunpack.c.0.s8 %v65
  %v67 = vlaneseq
  %v68 = vshrl.u32 %v67, 7
  %v69 = vsub.s32 %v66, %v68
  %v70 = vrot.slane %v62, %v69
  %v71 = vcombine.high %v70, %v70
  %v74 = vpack.c.bf16 %v70, %v70
  %v75 = vpack.c.bf16 %v71, %v71
  %v77 = vlaneseq
  %v78 = vshrl.u32 %v77, 7
  %v79 = vsub.s32 0, %v78
  %v80 = vrot.slane %v56, %v79
  %v114 = vunpack.c.l.b16 %v24
  %v115 = vunpack.c.l.b16 %v25
  %v116 = vunpack.c.l.b16 %v26
  %v117 = vunpack.c.l.b16 %v27
  %v118 = vunpack.c.l.b16 %v28
  %v119 = vunpack.c.l.b16 %v29
  %v120 = vunpack.c.l.b16 %v30
  %v121 = vunpack.c.l.b16 %v31
  %v122 = vunpack.c.l.b16 %v32
  %v123 = vunpack.c.l.b16 %v33
  %v124 = vunpack.c.l.b16 %v34
  %v125 = vunpack.c.l.b16 %v35
  %v126 = vunpack.c.l.b16 %v36
  %v127 = vunpack.c.l.b16 %v37
  %v128 = vunpack.c.l.b16 %v38
  %v129 = vunpack.c.l.b16 %v39
  %v130 = vunpack.c.l.b16 %v40
  %v131 = vunpack.c.l.b16 %v41
  %v132 = vunpack.c.l.b16 %v42
  %v133 = vunpack.c.l.b16 %v43
  %v134 = vunpack.c.l.b16 %v44
  %v135 = vunpack.c.l.b16 %v45
  %v136 = vunpack.c.l.b16 %v46
  %v137 = vunpack.c.l.b16 %v47
  %v138 = vunpack.c.l.b16 %v48
  %v139 = vunpack.c.l.b16 %v49
  %v140 = vunpack.c.l.b16 %v50
  %v141 = vunpack.c.l.b16 %v51
  %v142 = vunpack.c.l.b16 %v52
  %v143 = vunpack.c.l.b16 %v53
  %v144 = vunpack.c.l.b16 %v54
  %v145 = vunpack.c.l.b16 %v55
  %v146 = vpack.c.b16 %v115, %v114
  %v147 = vpack.c.b16 %v117, %v116
  %v148 = vpack.c.b16 %v119, %v118
  %v149 = vpack.c.b16 %v121, %v120
  %v150 = vpack.c.b16 %v123, %v122
  %v151 = vpack.c.b16 %v125, %v124
  %v152 = vpack.c.b16 %v127, %v126
  %v153 = vpack.c.b16 %v129, %v128
  %v154 = vpack.c.b16 %v131, %v130
  %v155 = vpack.c.b16 %v133, %v132
  %v156 = vpack.c.b16 %v135, %v134
  %v157 = vpack.c.b16 %v137, %v136
  %v158 = vpack.c.b16 %v139, %v138
  %v159 = vpack.c.b16 %v141, %v140
  %v160 = vpack.c.b16 %v143, %v142
  %v161 = vpack.c.b16 %v145, %v144
  %178 = vmatprep.subr.bf16.mxu0 0
  %179 = vmatpush1.bf16.msra.mxu0 %v146
  %180 = vmatprep.subr.bf16.mxu0 0
  %181 = vmatpush1.bf16.msra.mxu0 %v147
  %182 = vmatprep.subr.bf16.mxu0 0
  %183 = vmatpush1.bf16.msra.mxu0 %v148
  %184 = vmatprep.subr.bf16.mxu0 0
  %185 = vmatpush1.bf16.msra.mxu0 %v149
  %186 = vmatprep.subr.bf16.mxu0 0
  %187 = vmatpush1.bf16.msra.mxu0 %v150
  %188 = vmatprep.subr.bf16.mxu0 0
  %189 = vmatpush1.bf16.msra.mxu0 %v151
  %190 = vmatprep.subr.bf16.mxu0 0
  %191 = vmatpush1.bf16.msra.mxu0 %v152
  %192 = vmatprep.subr.bf16.mxu0 0
  %193 = vmatpush1.bf16.msra.mxu0 %v153
  %194 = vmatprep.subr.bf16.mxu0 0
  %195 = vmatpush1.bf16.msra.mxu0 %v154
  %196 = vmatprep.subr.bf16.mxu0 0
  %197 = vmatpush1.bf16.msra.mxu0 %v155
  %198 = vmatprep.subr.bf16.mxu0 0
  %199 = vmatpush1.bf16.msra.mxu0 %v156
  %200 = vmatprep.subr.bf16.mxu0 0
  %201 = vmatpush1.bf16.msra.mxu0 %v157
  %202 = vmatprep.subr.bf16.mxu0 0
  %203 = vmatpush1.bf16.msra.mxu0 %v158
  %204 = vmatprep.subr.bf16.mxu0 0
  %205 = vmatpush1.bf16.msra.mxu0 %v159
  %206 = vmatprep.subr.bf16.mxu0 0
  %207 = vmatpush1.bf16.msra.mxu0 %v160
  %208 = vmatprep.subr.bf16.mxu0 0
  %209 = vmatpush1.bf16.msra.mxu0 %v161
  %210 = vmatprep.mubr.bf16.mxu0 %v75
  %211 = vmatmul.mubr.bf16.gmra.mrb[0].mxu0 %v74
  %v212 = vpop.f32.mrb[0].mxu0
  %v213 = vadd.f32 %v80, %v212
  %v214 = vpop.f32.mrb[0].mxu0
  %v215 = vpop.f32.mrb[0].mxu0
  %v216 = vpop.f32.mrb[0].mxu0
  %217 = vdwg.mxu0
  %v218 = vmax.f32 %v213, 0.0
  %v219 = vpack.c.bf16 %v218, %v218
  %v221 = vlaneseq
  %v222 = vshrl.u32 %v221, 7
  %v223 = vsub.s32 0, %v222
  %v224 = vrot.slane %v61, %v223
  %v230 = vunpack.c.l.b16 %v57
  %v231 = vunpack.c.l.b16 %v58
  %v232 = vunpack.c.l.b16 %v59
  %v233 = vunpack.c.l.b16 %v60
  %v234 = vpack.c.b16 %v231, %v230
  %v235 = vpack.c.b16 %v233, %v232
  %vm238 = vcmask 261120
  %v240 = vsel %vm238, %v219, 0
  %242 = vmatprep.subr.bf16.mxu0 0
  %243 = vmatpush1.bf16.msra.mxu0 %v234
  %244 = vmatprep.subr.bf16.mxu0 0
  %245 = vmatpush1.bf16.msra.mxu0 %v235
  %246 = vmatprep.subr.bf16.mxu0 0
  %247 = vmatpush1.bf16.msra.mxu0 0
  %248 = vmatprep.subr.bf16.mxu0 0
  %249 = vmatpush1.bf16.msra.mxu0 0
  %250 = vmatprep.subr.bf16.mxu0 0
  %251 = vmatpush1.bf16.msra.mxu0 0
  %252 = vmatprep.subr.bf16.mxu0 0
  %253 = vmatpush1.bf16.msra.mxu0 0
  %254 = vmatprep.subr.bf16.mxu0 0
  %255 = vmatpush1.bf16.msra.mxu0 0
  %256 = vmatprep.subr.bf16.mxu0 0
  %257 = vmatpush1.bf16.msra.mxu0 0
  %258 = vmatprep.subr.bf16.mxu0 0
  %259 = vmatpush1.bf16.msra.mxu0 0
  %260 = vmatprep.subr.bf16.mxu0 0
  %261 = vmatpush1.bf16.msra.mxu0 0
  %262 = vmatprep.subr.bf16.mxu0 0
  %263 = vmatpush1.bf16.msra.mxu0 0
  %264 = vmatprep.subr.bf16.mxu0 0
  %265 = vmatpush1.bf16.msra.mxu0 0
  %266 = vmatprep.subr.bf16.mxu0 0
  %267 = vmatpush1.bf16.msra.mxu0 0
  %268 = vmatprep.subr.bf16.mxu0 0
  %269 = vmatpush1.bf16.msra.mxu0 0
  %270 = vmatprep.subr.bf16.mxu0 0
  %271 = vmatpush1.bf16.msra.mxu0 0
  %272 = vmatprep.subr.bf16.mxu0 0
  %273 = vmatpush1.bf16.msra.mxu0 0
  %274 = vmatprep.mubr.bf16.mxu0 0
  %275 = vmatmul.mubr.bf16.gmra.mrb[0].mxu0 %v240
  %v276 = vpop.f32.mrb[0].mxu0
  %v277 = vadd.f32 %v224, %v276
  %v278 = vpop.f32.mrb[0].mxu0
  %v279 = vpop.f32.mrb[0].mxu0
  %v280 = vpop.f32.mrb[0].mxu0
  %281 = vdwg.mxu0
  %v282 = vpack.c.bf16 %v277, %v277
  %283 = vst [vmem:[%s6] sm:$0x1] %v282
  %v284 = vld [vmem:[%s1] sm:$0xf]
  %v287 = vunpack.c.l.s4 1983009808
  %v288 = vunpack.c.0.s8 %v287
  %v289 = vlaneseq
  %v290 = vshrl.u32 %v289, 7
  %v291 = vsub.s32 %v288, %v290
  %v292 = vrot.slane %v284, %v291
  %v293 = vcombine.high %v292, %v292
  %v296 = vpack.c.bf16 %v292, %v292
  %v297 = vpack.c.bf16 %v293, %v293
  %298 = vmatprep.subr.bf16.mxu0 0
  %299 = vmatpush1.bf16.msra.mxu0 %v146
  %300 = vmatprep.subr.bf16.mxu0 0
  %301 = vmatpush1.bf16.msra.mxu0 %v147
  %302 = vmatprep.subr.bf16.mxu0 0
  %303 = vmatpush1.bf16.msra.mxu0 %v148
  %304 = vmatprep.subr.bf16.mxu0 0
  %305 = vmatpush1.bf16.msra.mxu0 %v149
  %306 = vmatprep.subr.bf16.mxu0 0
  %307 = vmatpush1.bf16.msra.mxu0 %v150
  %308 = vmatprep.subr.bf16.mxu0 0
  %309 = vmatpush1.bf16.msra.mxu0 %v151
  %310 = vmatprep.subr.bf16.mxu0 0
  %311 = vmatpush1.bf16.msra.mxu0 %v152
  %312 = vmatprep.subr.bf16.mxu0 0
  %313 = vmatpush1.bf16.msra.mxu0 %v153
  %314 = vmatprep.subr.bf16.mxu0 0
  %315 = vmatpush1.bf16.msra.mxu0 %v154
  %316 = vmatprep.subr.bf16.mxu0 0
  %317 = vmatpush1.bf16.msra.mxu0 %v155
  %318 = vmatprep.subr.bf16.mxu0 0
  %319 = vmatpush1.bf16.msra.mxu0 %v156
  %320 = vmatprep.subr.bf16.mxu0 0
  %321 = vmatpush1.bf16.msra.mxu0 %v157
  %322 = vmatprep.subr.bf16.mxu0 0
  %323 = vmatpush1.bf16.msra.mxu0 %v158
  %324 = vmatprep.subr.bf16.mxu0 0
  %325 = vmatpush1.bf16.msra.mxu0 %v159
  %326 = vmatprep.subr.bf16.mxu0 0
  %327 = vmatpush1.bf16.msra.mxu0 %v160
  %328 = vmatprep.subr.bf16.mxu0 0
  %329 = vmatpush1.bf16.msra.mxu0 %v161
  %330 = vmatprep.mubr.bf16.mxu0 %v297
  %331 = vmatmul.mubr.bf16.gmra.mrb[0].mxu0 %v296
  %v332 = vpop.f32.mrb[0].mxu0
  %v333 = vadd.f32 %v80, %v332
  %v334 = vpop.f32.mrb[0].mxu0
  %v335 = vpop.f32.mrb[0].mxu0
  %v336 = vpop.f32.mrb[0].mxu0
  %337 = vdwg.mxu0
  %v338 = vmax.f32 %v333, 0.0
  %v339 = vpack.c.bf16 %v338, %v338
  %v341 = vsel %vm238, %v339, 0
  %343 = vmatprep.subr.bf16.mxu0 0
  %344 = vmatpush1.bf16.msra.mxu0 %v234
  %345 = vmatprep.subr.bf16.mxu0 0
  %346 = vmatpush1.bf16.msra.mxu0 %v235
  %347 = vmatprep.subr.bf16.mxu0 0
  %348 = vmatpush1.bf16.msra.mxu0 0
  %349 = vmatprep.subr.bf16.mxu0 0
  %350 = vmatpush1.bf16.msra.mxu0 0
  %351 = vmatprep.subr.bf16.mxu0 0
  %352 = vmatpush1.bf16.msra.mxu0 0
  %353 = vmatprep.subr.bf16.mxu0 0
  %354 = vmatpush1.bf16.msra.mxu0 0
  %355 = vmatprep.subr.bf16.mxu0 0
  %356 = vmatpush1.bf16.msra.mxu0 0
  %357 = vmatprep.subr.bf16.mxu0 0
  %358 = vmatpush1.bf16.msra.mxu0 0
  %359 = vmatprep.subr.bf16.mxu0 0
  %360 = vmatpush1.bf16.msra.mxu0 0
  %361 = vmatprep.subr.bf16.mxu0 0
  %362 = vmatpush1.bf16.msra.mxu0 0
  %363 = vmatprep.subr.bf16.mxu0 0
  %364 = vmatpush1.bf16.msra.mxu0 0
  %365 = vmatprep.subr.bf16.mxu0 0
  %366 = vmatpush1.bf16.msra.mxu0 0
  %367 = vmatprep.subr.bf16.mxu0 0
  %368 = vmatpush1.bf16.msra.mxu0 0
  %369 = vmatprep.subr.bf16.mxu0 0
  %370 = vmatpush1.bf16.msra.mxu0 0
  %371 = vmatprep.subr.bf16.mxu0 0
  %372 = vmatpush1.bf16.msra.mxu0 0
  %373 = vmatprep.subr.bf16.mxu0 0
  %374 = vmatpush1.bf16.msra.mxu0 0
  %375 = vmatprep.mubr.bf16.mxu0 0
  %376 = vmatmul.mubr.bf16.gmra.mrb[0].mxu0 %v341
  %v377 = vpop.f32.mrb[0].mxu0
  %v378 = vadd.f32 %v224, %v377
  %v379 = vpop.f32.mrb[0].mxu0
  %v380 = vpop.f32.mrb[0].mxu0
  %v381 = vpop.f32.mrb[0].mxu0
  %382 = vdwg.mxu0
  %v383 = vpack.c.bf16 %v378, %v378
  %384 = vst [vmem:[%s6 + $0x1] sm:$0x1] %v383
  // Predicated region
  $region26: #{av_encoder_forward.2} parent=0 // pred_check
    _
  $region27: #{av_encoder_forward.2} parent=0 // pred_check_branch
    %386 = sbr.rel (0) target = $region29
  $region28: #{av_encoder_forward.2} parent=0 // pred_region
    _
  $region29: #{av_encoder_forward.2} parent=0 // pred_fallthru
    _
  // Predicated region
  $region30: #{av_encoder_forward.2} parent=0 // pred_check
    _
  $region31: #{av_encoder_forward.2} parent=0 // pred_check_branch
    %388 = sbr.rel (0) target = $region33
  $region32: #{av_encoder_forward.2} parent=0 // pred_region
    _
  $region33: #{av_encoder_forward.2} parent=0 // pred_fallthru
    _

// kernel: av_encoder_forward.3
$region0: #{av_encoder_forward.3}
  #allocation0 [shape = 'u32[]', space=smem, size = 0x4, offset = 0x4, fixed_abs, tag = 'smem constant byte address 0x4 - core index']
  #allocation1 [shape = 'u32[144,128]{1,0:T(1,128)}', space=vmem, size = 0x12000, scoped, tag = 'internal scratch']
  %s0 = inlined_call_operand.vmem [shape: f32[2,1024], index: 0, kind: input, shape index: {}]
  %s1 = inlined_call_operand.vmem [shape: f32[2,1024], index: 1, kind: input, shape index: {}]
  %s2 = inlined_call_operand.vmem [shape: bf16[1024,32], index: 2, kind: input, shape index: {}]
  %s3 = inlined_call_operand.vmem [shape: f32[1,32], index: 3, kind: input, shape index: {}]
  %s4 = inlined_call_operand.vmem [shape: bf16[32,128], index: 4, kind: input, shape index: {}]
  %s5 = inlined_call_operand.vmem [shape: f32[1,128], index: 5, kind: input, shape index: {}]
  %s6 = inlined_call_operand.vmem [shape: bf16[2,256], index: 6, kind: output, shape index: {}]
  %s7 = sld [smem:[#allocation0]]
  $region34: #{av_encoder_forward.3} parent=0
    _
  %s9 = ssub.s32 1, %s7
  %s10 = scalar_select 0, %s9, %s7
  // Predicated region
  $region2: #{av_encoder_forward.3} parent=0 // pred_check
    _
  $region3: #{av_encoder_forward.3} parent=0 // pred_check_branch
    %12 = sbr.rel (0) target = $region5
  $region4: #{av_encoder_forward.3} parent=0 // pred_region
    _
  $region5: #{av_encoder_forward.3} parent=0 // pred_fallthru
    _
  // Predicated region
  $region6: #{av_encoder_forward.3} parent=0 // pred_check
    _
  $region7: #{av_encoder_forward.3} parent=0 // pred_check_branch
    %14 = sbr.rel (0) target = $region9
  $region8: #{av_encoder_forward.3} parent=0 // pred_region
    _
  $region9: #{av_encoder_forward.3} parent=0 // pred_fallthru
    _
  // Predicated region
  $region10: #{av_encoder_forward.3} parent=0 // pred_check
    _
  $region11: #{av_encoder_forward.3} parent=0 // pred_check_branch
    %16 = sbr.rel (0) target = $region13
  $region12: #{av_encoder_forward.3} parent=0 // pred_region
    _
  $region13: #{av_encoder_forward.3} parent=0 // pred_fallthru
    _
  // Predicated region
  $region14: #{av_encoder_forward.3} parent=0 // pred_check
    _
  $region15: #{av_encoder_forward.3} parent=0 // pred_check_branch
    %18 = sbr.rel (0) target = $region17
  $region16: #{av_encoder_forward.3} parent=0 // pred_region
    _
  $region17: #{av_encoder_forward.3} parent=0 // pred_fallthru
    _
  // Predicated region
  $region18: #{av_encoder_forward.3} parent=0 // pred_check
    _
  $region19: #{av_encoder_forward.3} parent=0 // pred_check_branch
    %20 = sbr.rel (0) target = $region21
  $region20: #{av_encoder_forward.3} parent=0 // pred_region
    _
  $region21: #{av_encoder_forward.3} parent=0 // pred_fallthru
    _
  // Predicated region
  $region22: #{av_encoder_forward.3} parent=0 // pred_check
    _
  $region23: #{av_encoder_forward.3} parent=0 // pred_check_branch
    %22 = sbr.rel (0) target = $region25
  $region24: #{av_encoder_forward.3} parent=0 // pred_region
    _
  $region25: #{av_encoder_forward.3} parent=0 // pred_fallthru
    _
  %v24 = vld [vmem:[%s2] sm:$0xf]
  %v25 = vld [vmem:[%s2 + $0x4] sm:$0xf]
  %v26 = vld [vmem:[%s2 + $0x8] sm:$0xf]
  %v27 = vld [vmem:[%s2 + $0xc] sm:$0xf]
  %v28 = vld [vmem:[%s2 + $0x10] sm:$0xf]
  %v29 = vld [vmem:[%s2 + $0x14] sm:$0xf]
  %v30 = vld [vmem:[%s2 + $0x18] sm:$0xf]
  %v31 = vld [vmem:[%s2 + $0x1c] sm:$0xf]
  %v32 = vld [vmem:[%s2 + $0x20] sm:$0xf]
  %v33 = vld [vmem:[%s2 + $0x24] sm:$0xf]
  %v34 = vld [vmem:[%s2 + $0x28] sm:$0xf]
  %v35 = vld [vmem:[%s2 + $0x2c] sm:$0xf]
  %v36 = vld [vmem:[%s2 + $0x30] sm:$0xf]
  %v37 = vld [vmem:[%s2 + $0x34] sm:$0xf]
  %v38 = vld [vmem:[%s2 + $0x38] sm:$0xf]
  %v39 = vld [vmem:[%s2 + $0x3c] sm:$0xf]
  %v40 = vld [vmem:[%s2 + $0x40] sm:$0xf]
  %v41 = vld [vmem:[%s2 + $0x44] sm:$0xf]
  %v42 = vld [vmem:[%s2 + $0x48] sm:$0xf]
  %v43 = vld [vmem:[%s2 + $0x4c] sm:$0xf]
  %v44 = vld [vmem:[%s2 + $0x50] sm:$0xf]
  %v45 = vld [vmem:[%s2 + $0x54] sm:$0xf]
  %v46 = vld [vmem:[%s2 + $0x58] sm:$0xf]
  %v47 = vld [vmem:[%s2 + $0x5c] sm:$0xf]
  %v48 = vld [vmem:[%s2 + $0x60] sm:$0xf]
  %v49 = vld [vmem:[%s2 + $0x64] sm:$0xf]
  %v50 = vld [vmem:[%s2 + $0x68] sm:$0xf]
  %v51 = vld [vmem:[%s2 + $0x6c] sm:$0xf]
  %v52 = vld [vmem:[%s2 + $0x70] sm:$0xf]
  %v53 = vld [vmem:[%s2 + $0x74] sm:$0xf]
  %v54 = vld [vmem:[%s2 + $0x78] sm:$0xf]
  %v55 = vld [vmem:[%s2 + $0x7c] sm:$0xf]
  %v56 = vld [vmem:[%s2 + $0x80] sm:$0xf]
  %v57 = vld [vmem:[%s2 + $0x84] sm:$0xf]
  %v58 = vld [vmem:[%s2 + $0x88] sm:$0xf]
  %v59 = vld [vmem:[%s2 + $0x8c] sm:$0xf]
  %v60 = vld [vmem:[%s2 + $0x90] sm:$0xf]
  %v61 = vld [vmem:[%s2 + $0x94] sm:$0xf]
  %v62 = vld [vmem:[%s2 + $0x98] sm:$0xf]
  %v63 = vld [vmem:[%s2 + $0x9c] sm:$0xf]
  %v64 = vld [vmem:[%s2 + $0xa0] sm:$0xf]
  %v65 = vld [vmem:[%s2 + $0xa4] sm:$0xf]
  %v66 = vld [vmem:[%s2 + $0xa8] sm:$0xf]
  %v67 = vld [vmem:[%s2 + $0xac] sm:$0xf]
  %v68 = vld [vmem:[%s2 + $0xb0] sm:$0xf]
  %v69 = vld [vmem:[%s2 + $0xb4] sm:$0xf]
  %v70 = vld [vmem:[%s2 + $0xb8] sm:$0xf]
  %v71 = vld [vmem:[%s2 + $0xbc] sm:$0xf]
  %v72 = vld [vmem:[%s2 + $0xc0] sm:$0xf]
  %v73 = vld [vmem:[%s2 + $0xc4] sm:$0xf]
  %v74 = vld [vmem:[%s2 + $0xc8] sm:$0xf]
  %v75 = vld [vmem:[%s2 + $0xcc] sm:$0xf]
  %v76 = vld [vmem:[%s2 + $0xd0] sm:$0xf]
  %v77 = vld [vmem:[%s2 + $0xd4] sm:$0xf]
  %v78 = vld [vmem:[%s2 + $0xd8] sm:$0xf]
  %v79 = vld [vmem:[%s2 + $0xdc] sm:$0xf]
  %v80 = vld [vmem:[%s2 + $0xe0] sm:$0xf]
  %v81 = vld [vmem:[%s2 + $0xe4] sm:$0xf]
  %v82 = vld [vmem:[%s2 + $0xe8] sm:$0xf]
  %v83 = vld [vmem:[%s2 + $0xec] sm:$0xf]
  %v84 = vld [vmem:[%s2 + $0xf0] sm:$0xf]
  %v85 = vld [vmem:[%s2 + $0xf4] sm:$0xf]
  %v86 = vld [vmem:[%s2 + $0xf8] sm:$0xf]
  %v87 = vld [vmem:[%s2 + $0xfc] sm:$0xf]
  %v88 = vld [vmem:[%s2 + $0x100] sm:$0xf]
  %v89 = vld [vmem:[%s2 + $0x104] sm:$0xf]
  %v90 = vld [vmem:[%s2 + $0x108] sm:$0xf]
  %v91 = vld [vmem:[%s2 + $0x10c] sm:$0xf]
  %v92 = vld [vmem:[%s2 + $0x110] sm:$0xf]
  %v93 = vld [vmem:[%s2 + $0x114] sm:$0xf]
  %v94 = vld [vmem:[%s2 + $0x118] sm:$0xf]
  %v95 = vld [vmem:[%s2 + $0x11c] sm:$0xf]
  %v96 = vld [vmem:[%s2 + $0x120] sm:$0xf]
  %v97 = vld [vmem:[%s2 + $0x124] sm:$0xf]
  %v98 = vld [vmem:[%s2 + $0x128] sm:$0xf]
  %v99 = vld [vmem:[%s2 + $0x12c] sm:$0xf]
  %v100 = vld [vmem:[%s2 + $0x130] sm:$0xf]
  %v101 = vld [vmem:[%s2 + $0x134] sm:$0xf]
  %v102 = vld [vmem:[%s2 + $0x138] sm:$0xf]
  %v103 = vld [vmem:[%s2 + $0x13c] sm:$0xf]
  %v104 = vld [vmem:[%s2 + $0x140] sm:$0xf]
  %v105 = vld [vmem:[%s2 + $0x144] sm:$0xf]
  %v106 = vld [vmem:[%s2 + $0x148] sm:$0xf]
  %v107 = vld [vmem:[%s2 + $0x14c] sm:$0xf]
  %v108 = vld [vmem:[%s2 + $0x150] sm:$0xf]
  %v109 = vld [vmem:[%s2 + $0x154] sm:$0xf]
  %v110 = vld [vmem:[%s2 + $0x158] sm:$0xf]
  %v111 = vld [vmem:[%s2 + $0x15c] sm:$0xf]
  %v112 = vld [vmem:[%s2 + $0x160] sm:$0xf]
  %v113 = vld [vmem:[%s2 + $0x164] sm:$0xf]
  %v114 = vld [vmem:[%s2 + $0x168] sm:$0xf]
  %v115 = vld [vmem:[%s2 + $0x16c] sm:$0xf]
  %v116 = vld [vmem:[%s2 + $0x170] sm:$0xf]
  %v117 = vld [vmem:[%s2 + $0x174] sm:$0xf]
  %v118 = vld [vmem:[%s2 + $0x178] sm:$0xf]
  %v119 = vld [vmem:[%s2 + $0x17c] sm:$0xf]
  %v120 = vld [vmem:[%s2 + $0x180] sm:$0xf]
  %v121 = vld [vmem:[%s2 + $0x184] sm:$0xf]
  %v122 = vld [vmem:[%s2 + $0x188] sm:$0xf]
  %v123 = vld [vmem:[%s2 + $0x18c] sm:$0xf]
  %v124 = vld [vmem:[%s2 + $0x190] sm:$0xf]
  %v125 = vld [vmem:[%s2 + $0x194] sm:$0xf]
  %v126 = vld [vmem:[%s2 + $0x198] sm:$0xf]
  %v127 = vld [vmem:[%s2 + $0x19c] sm:$0xf]
  %v128 = vld [vmem:[%s2 + $0x1a0] sm:$0xf]
  %v129 = vld [vmem:[%s2 + $0x1a4] sm:$0xf]
  %v130 = vld [vmem:[%s2 + $0x1a8] sm:$0xf]
  %v131 = vld [vmem:[%s2 + $0x1ac] sm:$0xf]
  %v132 = vld [vmem:[%s2 + $0x1b0] sm:$0xf]
  %v133 = vld [vmem:[%s2 + $0x1b4] sm:$0xf]
  %v134 = vld [vmem:[%s2 + $0x1b8] sm:$0xf]
  %v135 = vld [vmem:[%s2 + $0x1bc] sm:$0xf]
  %v136 = vld [vmem:[%s2 + $0x1c0] sm:$0xf]
  %v137 = vld [vmem:[%s2 + $0x1c4] sm:$0xf]
  %v138 = vld [vmem:[%s2 + $0x1c8] sm:$0xf]
  %v139 = vld [vmem:[%s2 + $0x1cc] sm:$0xf]
  %v140 = vld [vmem:[%s2 + $0x1d0] sm:$0xf]
  %v141 = vld [vmem:[%s2 + $0x1d4] sm:$0xf]
  %v142 = vld [vmem:[%s2 + $0x1d8] sm:$0xf]
  %v143 = vld [vmem:[%s2 + $0x1dc] sm:$0xf]
  %v144 = vld [vmem:[%s2 + $0x1e0] sm:$0xf]
  %v145 = vld [vmem:[%s2 + $0x1e4] sm:$0xf]
  %v146 = vld [vmem:[%s2 + $0x1e8] sm:$0xf]
  %v147 = vld [vmem:[%s2 + $0x1ec] sm:$0xf]
  %v148 = vld [vmem:[%s2 + $0x1f0] sm:$0xf]
  %v149 = vld [vmem:[%s2 + $0x1f4] sm:$0xf]
  %v150 = vld [vmem:[%s2 + $0x1f8] sm:$0xf]
  %v151 = vld [vmem:[%s2 + $0x1fc] sm:$0xf]
  %v152 = vld [vmem:[%s3] sm:$0x1]
  %v153 = vld [vmem:[%s4] sm:$0xf]
  %v154 = vld [vmem:[%s4 + $0x4] sm:$0xf]
  %v155 = vld [vmem:[%s4 + $0x8] sm:$0xf]
  %v156 = vld [vmem:[%s4 + $0xc] sm:$0xf]
  %v157 = vld [vmem:[%s5] sm:$0x1]
  %v158 = vld [vmem:[%s0] sm:$0xff]
  %v159 = vld [vmem:[%s0 + $0x8] sm:$0xff]
  %v162 = vcombine.high %v158, %v158
  %v164 = vunpack.c.l.s4 1983009808
  %v165 = vunpack.c.0.s8 %v164
  %v166 = vlaneseq
  %v167 = vshrl.u32 %v166, 7
  %v168 = vsub.s32 %v165, %v167
  %v169 = vrot.slane %v158, %v168
  %v171 = vunpack.c.l.s4 1983009808
  %v172 = vunpack.c.0.s8 %v171
  %v173 = vlaneseq
  %v174 = vshrl.u32 %v173, 7
  %v175 = vsub.s32 %v172, %v174
  %v176 = vrot.slane %v162, %v175
  %v177 = vcombine.high %v169, %v169
  %v178 = vcombine.high %v176, %v176
  %v179 = vcombine.high %v159, %v159
  %v181 = vunpack.c.l.s4 1983009808
  %v182 = vunpack.c.0.s8 %v181
  %v183 = vlaneseq
  %v184 = vshrl.u32 %v183, 7
  %v185 = vsub.s32 %v182, %v184
  %v186 = vrot.slane %v159, %v185
  %v188 = vunpack.c.l.s4 1983009808
  %v189 = vunpack.c.0.s8 %v188
  %v190 = vlaneseq
  %v191 = vshrl.u32 %v190, 7
  %v192 = vsub.s32 %v189, %v191
  %v193 = vrot.slane %v179, %v192
  %v194 = vcombine.high %v186, %v186
  %v195 = vcombine.high %v193, %v193
  %v204 = vpack.c.bf16 %v169, %v169
  %v205 = vpack.c.bf16 %v177, %v177
  %v206 = vpack.c.bf16 %v176, %v176
  %v207 = vpack.c.bf16 %v178, %v178
  %v208 = vpack.c.bf16 %v186, %v186
  %v209 = vpack.c.bf16 %v194, %v194
  %v210 = vpack.c.bf16 %v193, %v193
  %v211 = vpack.c.bf16 %v195, %v195
  %v213 = vlaneseq
  %v214 = vshrl.u32 %v213, 7
  %v215 = vsub.s32 0, %v214
  %v216 = vrot.slane %v152, %v215
  %v346 = vunpack.c.l.b16 %v24
  %v347 = vunpack.c.l.b16 %v25
  %v348 = vunpack.c.l.b16 %v26
  %v349 = vunpack.c.l.b16 %v27
  %v350 = vunpack.c.l.b16 %v28
  %v351 = vunpack.c.l.b16 %v29
  %v352 = vunpack.c.l.b16 %v30
  %v353 = vunpack.c.l.b16 %v31
  %v354 = vunpack.c.l.b16 %v32
  %v355 = vunpack.c.l.b16 %v33
  %v356 = vunpack.c.l.b16 %v34
  %v357 = vunpack.c.l.b16 %v35
  %v358 = vunpack.c.l.b16 %v36
  %v359 = vunpack.c.l.b16 %v37
  %v360 = vunpack.c.l.b16 %v38
  %v361 = vunpack.c.l.b16 %v39
  %v362 = vunpack.c.l.b16 %v40
  %v363 = vunpack.c.l.b16 %v41
  %v364 = vunpack.c.l.b16 %v42
  %v365 = vunpack.c.l.b16 %v43
  %v366 = vunpack.c.l.b16 %v44
  %v367 = vunpack.c.l.b16 %v45
  %v368 = vunpack.c.l.b16 %v46
  %v369 = vunpack.c.l.b16 %v47
  %v370 = vunpack.c.l.b16 %v48
  %v371 = vunpack.c.l.b16 %v49
  %v372 = vunpack.c.l.b16 %v50
  %v373 = vunpack.c.l.b16 %v51
  %v374 = vunpack.c.l.b16 %v52
  %v375 = vunpack.c.l.b16 %v53
  %v376 = vunpack.c.l.b16 %v54
  %v377 = vunpack.c.l.b16 %v55
  %v378 = vunpack.c.l.b16 %v56
  %v379 = vunpack.c.l.b16 %v57
  %v380 = vunpack.c.l.b16 %v58
  %v381 = vunpack.c.l.b16 %v59
  %v382 = vunpack.c.l.b16 %v60
  %v383 = vunpack.c.l.b16 %v61
  %v384 = vunpack.c.l.b16 %v62
  %v385 = vunpack.c.l.b16 %v63
  %v386 = vunpack.c.l.b16 %v64
  %v387 = vunpack.c.l.b16 %v65
  %v388 = vunpack.c.l.b16 %v66
  %v389 = vunpack.c.l.b16 %v67
  %v390 = vunpack.c.l.b16 %v68
  %v391 = vunpack.c.l.b16 %v69
  %v392 = vunpack.c.l.b16 %v70
  %v393 = vunpack.c.l.b16 %v71
  %v394 = vunpack.c.l.b16 %v72
  %v395 = vunpack.c.l.b16 %v73
  %v396 = vunpack.c.l.b16 %v74
  %v397 = vunpack.c.l.b16 %v75
  %v398 = vunpack.c.l.b16 %v76
  %v399 = vunpack.c.l.b16 %v77
  %v400 = vunpack.c.l.b16 %v78
  %v401 = vunpack.c.l.b16 %v79
  %v402 = vunpack.c.l.b16 %v80
  %v403 = vunpack.c.l.b16 %v81
  %v404 = vunpack.c.l.b16 %v82
  %v405 = vunpack.c.l.b16 %v83
  %v406 = vunpack.c.l.b16 %v84
  %v407 = vunpack.c.l.b16 %v85
  %v408 = vunpack.c.l.b16 %v86
  %v409 = vunpack.c.l.b16 %v87
  %v410 = vunpack.c.l.b16 %v88
  %v411 = vunpack.c.l.b16 %v89
  %v412 = vunpack.c.l.b16 %v90
  %v413 = vunpack.c.l.b16 %v91
  %v414 = vunpack.c.l.b16 %v92
  %v415 = vunpack.c.l.b16 %v93
  %v416 = vunpack.c.l.b16 %v94
  %v417 = vunpack.c.l.b16 %v95
  %v418 = vunpack.c.l.b16 %v96
  %v419 = vunpack.c.l.b16 %v97
  %v420 = vunpack.c.l.b16 %v98
  %v421 = vunpack.c.l.b16 %v99
  %v422 = vunpack.c.l.b16 %v100
  %v423 = vunpack.c.l.b16 %v101
  %v424 = vunpack.c.l.b16 %v102
  %v425 = vunpack.c.l.b16 %v103
  %v426 = vunpack.c.l.b16 %v104
  %v427 = vunpack.c.l.b16 %v105
  %v428 = vunpack.c.l.b16 %v106
  %v429 = vunpack.c.l.b16 %v107
  %v430 = vunpack.c.l.b16 %v108
  %v431 = vunpack.c.l.b16 %v109
  %v432 = vunpack.c.l.b16 %v110
  %v433 = vunpack.c.l.b16 %v111
  %v434 = vunpack.c.l.b16 %v112
  %v435 = vunpack.c.l.b16 %v113
  %v436 = vunpack.c.l.b16 %v114
  %v437 = vunpack.c.l.b16 %v115
  %v438 = vunpack.c.l.b16 %v116
  %v439 = vunpack.c.l.b16 %v117
  %v440 = vunpack.c.l.b16 %v118
  %v441 = vunpack.c.l.b16 %v119
  %v442 = vunpack.c.l.b16 %v120
  %v443 = vunpack.c.l.b16 %v121
  %v444 = vunpack.c.l.b16 %v122
  %v445 = vunpack.c.l.b16 %v123
  %v446 = vunpack.c.l.b16 %v124
  %v447 = vunpack.c.l.b16 %v125
  %v448 = vunpack.c.l.b16 %v126
  %v449 = vunpack.c.l.b16 %v127
  %v450 = vunpack.c.l.b16 %v128
  %v451 = vunpack.c.l.b16 %v129
  %v452 = vunpack.c.l.b16 %v130
  %v453 = vunpack.c.l.b16 %v131
  %v454 = vunpack.c.l.b16 %v132
  %v455 = vunpack.c.l.b16 %v133
  %v456 = vunpack.c.l.b16 %v134
  %v457 = vunpack.c.l.b16 %v135
  %v458 = vunpack.c.l.b16 %v136
  %v459 = vunpack.c.l.b16 %v137
  %v460 = vunpack.c.l.b16 %v138
  %v461 = vunpack.c.l.b16 %v139
  %v462 = vunpack.c.l.b16 %v140
  %v463 = vunpack.c.l.b16 %v141
  %v464 = vunpack.c.l.b16 %v142
  %v465 = vunpack.c.l.b16 %v143
  %v466 = vunpack.c.l.b16 %v144
  %v467 = vunpack.c.l.b16 %v145
  %v468 = vunpack.c.l.b16 %v146
  %v469 = vunpack.c.l.b16 %v147
  %v470 = vunpack.c.l.b16 %v148
  %v471 = vunpack.c.l.b16 %v149
  %v472 = vunpack.c.l.b16 %v150
  %v473 = vunpack.c.l.b16 %v151
  %v474 = vpack.c.b16 %v347, %v346
  %v475 = vpack.c.b16 %v349, %v348
  %v476 = vpack.c.b16 %v351, %v350
  %v477 = vpack.c.b16 %v353, %v352
  %v478 = vpack.c.b16 %v355, %v354
  %v479 = vpack.c.b16 %v357, %v356
  %v480 = vpack.c.b16 %v359, %v358
  %v481 = vpack.c.b16 %v361, %v360
  %v482 = vpack.c.b16 %v363, %v362
  %v483 = vpack.c.b16 %v365, %v364
  %v484 = vpack.c.b16 %v367, %v366
  %v485 = vpack.c.b16 %v369, %v368
  %v486 = vpack.c.b16 %v371, %v370
  %v487 = vpack.c.b16 %v373, %v372
  %v488 = vpack.c.b16 %v375, %v374
  %v489 = vpack.c.b16 %v377, %v376
  %v490 = vpack.c.b16 %v379, %v378
  %v491 = vpack.c.b16 %v381, %v380
  %v492 = vpack.c.b16 %v383, %v382
  %v493 = vpack.c.b16 %v385, %v384
  %v494 = vpack.c.b16 %v387, %v386
  %v495 = vpack.c.b16 %v389, %v388
  %v496 = vpack.c.b16 %v391, %v390
  %v497 = vpack.c.b16 %v393, %v392
  %v498 = vpack.c.b16 %v395, %v394
  %v499 = vpack.c.b16 %v397, %v396
  %v500 = vpack.c.b16 %v399, %v398
  %v501 = vpack.c.b16 %v401, %v400
  %v502 = vpack.c.b16 %v403, %v402
  %v503 = vpack.c.b16 %v405, %v404
  %v504 = vpack.c.b16 %v407, %v406
  %v505 = vpack.c.b16 %v409, %v408
  %v506 = vpack.c.b16 %v411, %v410
  %v507 = vpack.c.b16 %v413, %v412
  %v508 = vpack.c.b16 %v415, %v414
  %v509 = vpack.c.b16 %v417, %v416
  %v510 = vpack.c.b16 %v419, %v418
  %v511 = vpack.c.b16 %v421, %v420
  %v512 = vpack.c.b16 %v423, %v422
  %v513 = vpack.c.b16 %v425, %v424
  %v514 = vpack.c.b16 %v427, %v426
  %v515 = vpack.c.b16 %v429, %v428
  %v516 = vpack.c.b16 %v431, %v430
  %v517 = vpack.c.b16 %v433, %v432
  %v518 = vpack.c.b16 %v435, %v434
  %v519 = vpack.c.b16 %v437, %v436
  %v520 = vpack.c.b16 %v439, %v438
  %v521 = vpack.c.b16 %v441, %v440
  %v522 = vpack.c.b16 %v443, %v442
  %v523 = vpack.c.b16 %v445, %v444
  %v524 = vpack.c.b16 %v447, %v446
  %v525 = vpack.c.b16 %v449, %v448
  %v526 = vpack.c.b16 %v451, %v450
  %v527 = vpack.c.b16 %v453, %v452
  %v528 = vpack.c.b16 %v455, %v454
  %v529 = vpack.c.b16 %v457, %v456
  %v530 = vpack.c.b16 %v459, %v458
  %v531 = vpack.c.b16 %v461, %v460
  %v532 = vpack.c.b16 %v463, %v462
  %v533 = vpack.c.b16 %v465, %v464
  %v534 = vpack.c.b16 %v467, %v466
  %v535 = vpack.c.b16 %v469, %v468
  %v536 = vpack.c.b16 %v471, %v470
  %v537 = vpack.c.b16 %v473, %v472
  %602 = vmatprep.subr.bf16.mxu0 0
  %603 = vmatpush1.bf16.msra.mxu0 %v474
  %604 = vmatprep.subr.bf16.mxu0 0
  %605 = vmatpush1.bf16.msra.mxu0 %v475
  %606 = vmatprep.subr.bf16.mxu0 0
  %607 = vmatpush1.bf16.msra.mxu0 %v476
  %608 = vmatprep.subr.bf16.mxu0 0
  %609 = vmatpush1.bf16.msra.mxu0 %v477
  %610 = vmatprep.subr.bf16.mxu0 0
  %611 = vmatpush1.bf16.msra.mxu0 %v478
  %612 = vmatprep.subr.bf16.mxu0 0
  %613 = vmatpush1.bf16.msra.mxu0 %v479
  %614 = vmatprep.subr.bf16.mxu0 0
  %615 = vmatpush1.bf16.msra.mxu0 %v480
  %616 = vmatprep.subr.bf16.mxu0 0
  %617 = vmatpush1.bf16.msra.mxu0 %v481
  %618 = vmatprep.subr.bf16.mxu0 0
  %619 = vmatpush1.bf16.msra.mxu0 %v482
  %620 = vmatprep.subr.bf16.mxu0 0
  %621 = vmatpush1.bf16.msra.mxu0 %v483
  %622 = vmatprep.subr.bf16.mxu0 0
  %623 = vmatpush1.bf16.msra.mxu0 %v484
  %624 = vmatprep.subr.bf16.mxu0 0
  %625 = vmatpush1.bf16.msra.mxu0 %v485
  %626 = vmatprep.subr.bf16.mxu0 0
  %627 = vmatpush1.bf16.msra.mxu0 %v486
  %628 = vmatprep.subr.bf16.mxu0 0
  %629 = vmatpush1.bf16.msra.mxu0 %v487
  %630 = vmatprep.subr.bf16.mxu0 0
  %631 = vmatpush1.bf16.msra.mxu0 %v488
  %632 = vmatprep.subr.bf16.mxu0 0
  %633 = vmatpush1.bf16.msra.mxu0 %v489
  %634 = vmatprep.mubr.bf16.mxu0 %v205
  %635 = vmatmul.mubr.bf16.gmra.mrb[0].mxu0 %v204
  %v636 = vpop.f32.mrb[0].mxu0
  %v637 = vadd.f32 %v216, %v636
  %v638 = vpop.f32.mrb[0].mxu0
  %v639 = vpop.f32.mrb[0].mxu0
  %v640 = vpop.f32.mrb[0].mxu0
  %641 = vdwg.mxu0
  %642 = vmatprep.subr.bf16.mxu0 0
  %643 = vmatpush1.bf16.msra.mxu0 %v490
  %644 = vmatprep.subr.bf16.mxu0 0
  %645 = vmatpush1.bf16.msra.mxu0 %v491
  %646 = vmatprep.subr.bf16.mxu0 0
  %647 = vmatpush1.bf16.msra.mxu0 %v492
  %648 = vmatprep.subr.bf16.mxu0 0
  %649 = vmatpush1.bf16.msra.mxu0 %v493
  %650 = vmatprep.subr.bf16.mxu0 0
  %651 = vmatpush1.bf16.msra.mxu0 %v494
  %652 = vmatprep.subr.bf16.mxu0 0
  %653 = vmatpush1.bf16.msra.mxu0 %v495
  %654 = vmatprep.subr.bf16.mxu0 0
  %655 = vmatpush1.bf16.msra.mxu0 %v496
  %656 = vmatprep.subr.bf16.mxu0 0
  %657 = vmatpush1.bf16.msra.mxu0 %v497
  %658 = vmatprep.subr.bf16.mxu0 0
  %659 = vmatpush1.bf16.msra.mxu0 %v498
  %660 = vmatprep.subr.bf16.mxu0 0
  %661 = vmatpush1.bf16.msra.mxu0 %v499
  %662 = vmatprep.subr.bf16.mxu0 0
  %663 = vmatpush1.bf16.msra.mxu0 %v500
  %664 = vmatprep.subr.bf16.mxu0 0
  %665 = vmatpush1.bf16.msra.mxu0 %v501
  %666 = vmatprep.subr.bf16.mxu0 0
  %667 = vmatpush1.bf16.msra.mxu0 %v502
  %668 = vmatprep.subr.bf16.mxu0 0
  %669 = vmatpush1.bf16.msra.mxu0 %v503
  %670 = vmatprep.subr.bf16.mxu0 0
  %671 = vmatpush1.bf16.msra.mxu0 %v504
  %672 = vmatprep.subr.bf16.mxu0 0
  %673 = vmatpush1.bf16.msra.mxu0 %v505
  %674 = vmatprep.mubr.bf16.mxu0 %v207
  %675 = vmatmul.mubr.bf16.gmra.mrb[0].mxu0 %v206
  %v676 = vpop.f32.mrb[0].mxu0
  %v677 = vadd.f32 %v637, %v676
  %v678 = vpop.f32.mrb[0].mxu0
  %v679 = vpop.f32.mrb[0].mxu0
  %v680 = vpop.f32.mrb[0].mxu0
  %681 = vdwg.mxu0
  %682 = vmatprep.subr.bf16.mxu0 0
  %683 = vmatpush1.bf16.msra.mxu0 %v506
  %684 = vmatprep.subr.bf16.mxu0 0
  %685 = vmatpush1.bf16.msra.mxu0 %v507
  %686 = vmatprep.subr.bf16.mxu0 0
  %687 = vmatpush1.bf16.msra.mxu0 %v508
  %688 = vmatprep.subr.bf16.mxu0 0
  %689 = vmatpush1.bf16.msra.mxu0 %v509
  %690 = vmatprep.subr.bf16.mxu0 0
  %691 = vmatpush1.bf16.msra.mxu0 %v510
  %692 = vmatprep.subr.bf16.mxu0 0
  %693 = vmatpush1.bf16.msra.mxu0 %v511
  %694 = vmatprep.subr.bf16.mxu0 0
  %695 = vmatpush1.bf16.msra.mxu0 %v512
  %696 = vmatprep.subr.bf16.mxu0 0
  %697 = vmatpush1.bf16.msra.mxu0 %v513
  %698 = vmatprep.subr.bf16.mxu0 0
  %699 = vmatpush1.bf16.msra.mxu0 %v514
  %700 = vmatprep.subr.bf16.mxu0 0
  %701 = vmatpush1.bf16.msra.mxu0 %v515
  %702 = vmatprep.subr.bf16.mxu0 0
  %703 = vmatpush1.bf16.msra.mxu0 %v516
  %704 = vmatprep.subr.bf16.mxu0 0
  %705 = vmatpush1.bf16.msra.mxu0 %v517
  %706 = vmatprep.subr.bf16.mxu0 0
  %707 = vmatpush1.bf16.msra.mxu0 %v518
  %708 = vmatprep.subr.bf16.mxu0 0
  %709 = vmatpush1.bf16.msra.mxu0 %v519
  %710 = vmatprep.subr.bf16.mxu0 0
  %711 = vmatpush1.bf16.msra.mxu0 %v520
  %712 = vmatprep.subr.bf16.mxu0 0
  %713 = vmatpush1.bf16.msra.mxu0 %v521
  %714 = vmatprep.mubr.bf16.mxu0 %v209
  %715 = vmatmul.mubr.bf16.gmra.mrb[0].mxu0 %v208
  %v716 = vpop.f32.mrb[0].mxu0
  %v717 = vadd.f32 %v677, %v716
  %v718 = vpop.f32.mrb[0].mxu0
  %v719 = vpop.f32.mrb[0].mxu0
  %v720 = vpop.f32.mrb[0].mxu0
  %721 = vdwg.mxu0
  %722 = vmatprep.subr.bf16.mxu0 0
  %723 = vmatpush1.bf16.msra.mxu0 %v522
  %724 = vmatprep.subr.bf16.mxu0 0
  %725 = vmatpush1.bf16.msra.mxu0 %v523
  %726 = vmatprep.subr.bf16.mxu0 0
  %727 = vmatpush1.bf16.msra.mxu0 %v524
  %728 = vmatprep.subr.bf16.mxu0 0
  %729 = vmatpush1.bf16.msra.mxu0 %v525
  %730 = vmatprep.subr.bf16.mxu0 0
  %731 = vmatpush1.bf16.msra.mxu0 %v526
  %732 = vmatprep.subr.bf16.mxu0 0
  %733 = vmatpush1.bf16.msra.mxu0 %v527
  %734 = vmatprep.subr.bf16.mxu0 0
  %735 = vmatpush1.bf16.msra.mxu0 %v528
  %736 = vmatprep.subr.bf16.mxu0 0
  %737 = vmatpush1.bf16.msra.mxu0 %v529
  %738 = vmatprep.subr.bf16.mxu0 0
  %739 = vmatpush1.bf16.msra.mxu0 %v530
  %740 = vmatprep.subr.bf16.mxu0 0
  %741 = vmatpush1.bf16.msra.mxu0 %v531
  %742 = vmatprep.subr.bf16.mxu0 0
  %743 = vmatpush1.bf16.msra.mxu0 %v532
  %744 = vmatprep.subr.bf16.mxu0 0
  %745 = vmatpush1.bf16.msra.mxu0 %v533
  %746 = vmatprep.subr.bf16.mxu0 0
  %747 = vmatpush1.bf16.msra.mxu0 %v534
  %748 = vmatprep.subr.bf16.mxu0 0
  %749 = vmatpush1.bf16.msra.mxu0 %v535
  %750 = vmatprep.subr.bf16.mxu0 0
  %751 = vmatpush1.bf16.msra.mxu0 %v536
  %752 = vmatprep.subr.bf16.mxu0 0
  %753 = vmatpush1.bf16.msra.mxu0 %v537
  %754 = vmatprep.mubr.bf16.mxu0 %v211
  %755 = vmatmul.mubr.bf16.gmra.mrb[0].mxu0 %v210
  %v756 = vpop.f32.mrb[0].mxu0
  %v757 = vadd.f32 %v717, %v756
  %v758 = vpop.f32.mrb[0].mxu0
  %v759 = vpop.f32.mrb[0].mxu0
  %v760 = vpop.f32.mrb[0].mxu0
  %761 = vdwg.mxu0
  %v762 = vmax.f32 %v757, 0.0
  %v763 = vpack.c.bf16 %v762, %v762
  %v765 = vlaneseq
  %v766 = vshrl.u32 %v765, 7
  %v767 = vsub.s32 0, %v766
  %v768 = vrot.slane %v157, %v767
  %v774 = vunpack.c.l.b16 %v153
  %v775 = vunpack.c.l.b16 %v154
  %v776 = vunpack.c.l.b16 %v155
  %v777 = vunpack.c.l.b16 %v156
  %v778 = vpack.c.b16 %v775, %v774
  %v779 = vpack.c.b16 %v777, %v776
  %vm782 = vcmask 261120
  %v784 = vsel %vm782, %v763, 0
  %786 = vmatprep.subr.bf16.mxu0 0
  %787 = vmatpush1.bf16.msra.mxu0 %v778
  %788 = vmatprep.subr.bf16.mxu0 0
  %789 = vmatpush1.bf16.msra.mxu0 %v779
  %790 = vmatprep.subr.bf16.mxu0 0
  %791 = vmatpush1.bf16.msra.mxu0 0
  %792 = vmatprep.subr.bf16.mxu0 0
  %793 = vmatpush1.bf16.msra.mxu0 0
  %794 = vmatprep.subr.bf16.mxu0 0
  %795 = vmatpush1.bf16.msra.mxu0 0
  %796 = vmatprep.subr.bf16.mxu0 0
  %797 = vmatpush1.bf16.msra.mxu0 0
  %798 = vmatprep.subr.bf16.mxu0 0
  %799 = vmatpush1.bf16.msra.mxu0 0
  %800 = vmatprep.subr.bf16.mxu0 0
  %801 = vmatpush1.bf16.msra.mxu0 0
  %802 = vmatprep.subr.bf16.mxu0 0
  %803 = vmatpush1.bf16.msra.mxu0 0
  %804 = vmatprep.subr.bf16.mxu0 0
  %805 = vmatpush1.bf16.msra.mxu0 0
  %806 = vmatprep.subr.bf16.mxu0 0
  %807 = vmatpush1.bf16.msra.mxu0 0
  %808 = vmatprep.subr.bf16.mxu0 0
  %809 = vmatpush1.bf16.msra.mxu0 0
  %810 = vmatprep.subr.bf16.mxu0 0
  %811 = vmatpush1.bf16.msra.mxu0 0
  %812 = vmatprep.subr.bf16.mxu0 0
  %813 = vmatpush1.bf16.msra.mxu0 0
  %814 = vmatprep.subr.bf16.mxu0 0
  %815 = vmatpush1.bf16.msra.mxu0 0
  %816 = vmatprep.subr.bf16.mxu0 0
  %817 = vmatpush1.bf16.msra.mxu0 0
  %818 = vmatprep.mubr.bf16.mxu0 0
  %819 = vmatmul.mubr.bf16.gmra.mrb[0].mxu0 %v784
  %v820 = vpop.f32.mrb[0].mxu0
  %v821 = vadd.f32 %v768, %v820
  %v822 = vpop.f32.mrb[0].mxu0
  %v823 = vpop.f32.mrb[0].mxu0
  %v824 = vpop.f32.mrb[0].mxu0
  %825 = vdwg.mxu0
  %v826 = vpack.c.bf16 %v821, %v821
  %827 = vst [vmem:[%s6] sm:$0x1] %v826
  %v828 = vld [vmem:[%s1] sm:$0xff]
  %v829 = vld [vmem:[%s1 + $0x8] sm:$0xff]
  %v832 = vcombine.high %v828, %v828
  %v834 = vunpack.c.l.s4 1983009808
  %v835 = vunpack.c.0.s8 %v834
  %v836 = vlaneseq
  %v837 = vshrl.u32 %v836, 7
  %v838 = vsub.s32 %v835, %v837
  %v839 = vrot.slane %v828, %v838
  %v841 = vunpack.c.l.s4 1983009808
  %v842 = vunpack.c.0.s8 %v841
  %v843 = vlaneseq
  %v844 = vshrl.u32 %v843, 7
  %v845 = vsub.s32 %v842, %v844
  %v846 = vrot.slane %v832, %v845
  %v847 = vcombine.high %v839, %v839
  %v848 = vcombine.high %v846, %v846
  %v849 = vcombine.high %v829, %v829
  %v851 = vunpack.c.l.s4 1983009808
  %v852 = vunpack.c.0.s8 %v851
  %v853 = vlaneseq
  %v854 = vshrl.u32 %v853, 7
  %v855 = vsub.s32 %v852, %v854
  %v856 = vrot.slane %v829, %v855
  %v858 = vunpack.c.l.s4 1983009808
  %v859 = vunpack.c.0.s8 %v858
  %v860 = vlaneseq
  %v861 = vshrl.u32 %v860, 7
  %v862 = vsub.s32 %v859, %v861
  %v863 = vrot.slane %v849, %v862
  %v864 = vcombine.high %v856, %v856
  %v865 = vcombine.high %v863, %v863
  %v874 = vpack.c.bf16 %v839, %v839
  %v875 = vpack.c.bf16 %v847, %v847
  %v876 = vpack.c.bf16 %v846, %v846
  %v877 = vpack.c.bf16 %v848, %v848
  %v878 = vpack.c.bf16 %v856, %v856
  %v879 = vpack.c.bf16 %v864, %v864
  %v880 = vpack.c.bf16 %v863, %v863
  %v881 = vpack.c.bf16 %v865, %v865
  %882 = vmatprep.subr.bf16.mxu0 0
  %883 = vmatpush1.bf16.msra.mxu0 %v474
  %884 = vmatprep.subr.bf16.mxu0 0
  %885 = vmatpush1.bf16.msra.mxu0 %v475
  %886 = vmatprep.subr.bf16.mxu0 0
  %887 = vmatpush1.bf16.msra.mxu0 %v476
  %888 = vmatprep.subr.bf16.mxu0 0
  %889 = vmatpush1.bf16.msra.mxu0 %v477
  %890 = vmatprep.subr.bf16.mxu0 0
  %891 = vmatpush1.bf16.msra.mxu0 %v478
  %892 = vmatprep.subr.bf16.mxu0 0
  %893 = vmatpush1.bf16.msra.mxu0 %v479
  %894 = vmatprep.subr.bf16.mxu0 0
  %895 = vmatpush1.bf16.msra.mxu0 %v480
  %896 = vmatprep.subr.bf16.mxu0 0
  %897 = vmatpush1.bf16.msra.mxu0 %v481
  %898 = vmatprep.subr.bf16.mxu0 0
  %899 = vmatpush1.bf16.msra.mxu0 %v482
  %900 = vmatprep.subr.bf16.mxu0 0
  %901 = vmatpush1.bf16.msra.mxu0 %v483
  %902 = vmatprep.subr.bf16.mxu0 0
  %903 = vmatpush1.bf16.msra.mxu0 %v484
  %904 = vmatprep.subr.bf16.mxu0 0
  %905 = vmatpush1.bf16.msra.mxu0 %v485
  %906 = vmatprep.subr.bf16.mxu0 0
  %907 = vmatpush1.bf16.msra.mxu0 %v486
  %908 = vmatprep.subr.bf16.mxu0 0
  %909 = vmatpush1.bf16.msra.mxu0 %v487
  %910 = vmatprep.subr.bf16.mxu0 0
  %911 = vmatpush1.bf16.msra.mxu0 %v488
  %912 = vmatprep.subr.bf16.mxu0 0
  %913 = vmatpush1.bf16.msra.mxu0 %v489
  %914 = vmatprep.mubr.bf16.mxu0 %v875
  %915 = vmatmul.mubr.bf16.gmra.mrb[0].mxu0 %v874
  %v916 = vpop.f32.mrb[0].mxu0
  %v917 = vadd.f32 %v216, %v916
  %v918 = vpop.f32.mrb[0].mxu0
  %v919 = vpop.f32.mrb[0].mxu0
  %v920 = vpop.f32.mrb[0].mxu0
  %921 = vdwg.mxu0
  %922 = vmatprep.subr.bf16.mxu0 0
  %923 = vmatpush1.bf16.msra.mxu0 %v490
  %924 = vmatprep.subr.bf16.mxu0 0
  %925 = vmatpush1.bf16.msra.mxu0 %v491
  %926 = vmatprep.subr.bf16.mxu0 0
  %927 = vmatpush1.bf16.msra.mxu0 %v492
  %928 = vmatprep.subr.bf16.mxu0 0
  %929 = vmatpush1.bf16.msra.mxu0 %v493
  %930 = vmatprep.subr.bf16.mxu0 0
  %931 = vmatpush1.bf16.msra.mxu0 %v494
  %932 = vmatprep.subr.bf16.mxu0 0
  %933 = vmatpush1.bf16.msra.mxu0 %v495
  %934 = vmatprep.subr.bf16.mxu0 0
  %935 = vmatpush1.bf16.msra.mxu0 %v496
  %936 = vmatprep.subr.bf16.mxu0 0
  %937 = vmatpush1.bf16.msra.mxu0 %v497
  %938 = vmatprep.subr.bf16.mxu0 0
  %939 = vmatpush1.bf16.msra.mxu0 %v498
  %940 = vmatprep.subr.bf16.mxu0 0
  %941 = vmatpush1.bf16.msra.mxu0 %v499
  %942 = vmatprep.subr.bf16.mxu0 0
  %943 = vmatpush1.bf16.msra.mxu0 %v500
  %944 = vmatprep.subr.bf16.mxu0 0
  %945 = vmatpush1.bf16.msra.mxu0 %v501
  %946 = vmatprep.subr.bf16.mxu0 0
  %947 = vmatpush1.bf16.msra.mxu0 %v502
  %948 = vmatprep.subr.bf16.mxu0 0
  %949 = vmatpush1.bf16.msra.mxu0 %v503
  %950 = vmatprep.subr.bf16.mxu0 0
  %951 = vmatpush1.bf16.msra.mxu0 %v504
  %952 = vmatprep.subr.bf16.mxu0 0
  %953 = vmatpush1.bf16.msra.mxu0 %v505
  %954 = vmatprep.mubr.bf16.mxu0 %v877
  %955 = vmatmul.mubr.bf16.gmra.mrb[0].mxu0 %v876
  %v956 = vpop.f32.mrb[0].mxu0
  %v957 = vadd.f32 %v917, %v956
  %v958 = vpop.f32.mrb[0].mxu0
  %v959 = vpop.f32.mrb[0].mxu0
  %v960 = vpop.f32.mrb[0].mxu0
  %961 = vdwg.mxu0
  %962 = vmatprep.subr.bf16.mxu0 0
  %963 = vmatpush1.bf16.msra.mxu0 %v506
  %964 = vmatprep.subr.bf16.mxu0 0
  %965 = vmatpush1.bf16.msra.mxu0 %v507
  %966 = vmatprep.subr.bf16.mxu0 0
  %967 = vmatpush1.bf16.msra.mxu0 %v508
  %968 = vmatprep.subr.bf16.mxu0 0
  %969 = vmatpush1.bf16.msra.mxu0 %v509
  %970 = vmatprep.subr.bf16.mxu0 0
  %971 = vmatpush1.bf16.msra.mxu0 %v510
  %972 = vmatprep.subr.bf16.mxu0 0
  %973 = vmatpush1.bf16.msra.mxu0 %v511
  %974 = vmatprep.subr.bf16.mxu0 0
  %975 = vmatpush1.bf16.msra.mxu0 %v512
  %976 = vmatprep.subr.bf16.mxu0 0
  %977 = vmatpush1.bf16.msra.mxu0 %v513
  %978 = vmatprep.subr.bf16.mxu0 0
  %979 = vmatpush1.bf16.msra.mxu0 %v514
  %980 = vmatprep.subr.bf16.mxu0 0
  %981 = vmatpush1.bf16.msra.mxu0 %v515
  %982 = vmatprep.subr.bf16.mxu0 0
  %983 = vmatpush1.bf16.msra.mxu0 %v516
  %984 = vmatprep.subr.bf16.mxu0 0
  %985 = vmatpush1.bf16.msra.mxu0 %v517
  %986 = vmatprep.subr.bf16.mxu0 0
  %987 = vmatpush1.bf16.msra.mxu0 %v518
  %988 = vmatprep.subr.bf16.mxu0 0
  %989 = vmatpush1.bf16.msra.mxu0 %v519
  %990 = vmatprep.subr.bf16.mxu0 0
  %991 = vmatpush1.bf16.msra.mxu0 %v520
  %992 = vmatprep.subr.bf16.mxu0 0
  %993 = vmatpush1.bf16.msra.mxu0 %v521
  %994 = vmatprep.mubr.bf16.mxu0 %v879
  %995 = vmatmul.mubr.bf16.gmra.mrb[0].mxu0 %v878
  %v996 = vpop.f32.mrb[0].mxu0
  %v997 = vadd.f32 %v957, %v996
  %v998 = vpop.f32.mrb[0].mxu0
  %v999 = vpop.f32.mrb[0].mxu0
  %v1000 = vpop.f32.mrb[0].mxu0
  %1001 = vdwg.mxu0
  %1002 = vmatprep.subr.bf16.mxu0 0
  %1003 = vmatpush1.bf16.msra.mxu0 %v522
  %1004 = vmatprep.subr.bf16.mxu0 0
  %1005 = vmatpush1.bf16.msra.mxu0 %v523
  %1006 = vmatprep.subr.bf16.mxu0 0
  %1007 = vmatpush1.bf16.msra.mxu0 %v524
  %1008 = vmatprep.subr.bf16.mxu0 0
  %1009 = vmatpush1.bf16.msra.mxu0 %v525
  %1010 = vmatprep.subr.bf16.mxu0 0
  %1011 = vmatpush1.bf16.msra.mxu0 %v526
  %1012 = vmatprep.subr.bf16.mxu0 0
  %1013 = vmatpush1.bf16.msra.mxu0 %v527
  %1014 = vmatprep.subr.bf16.mxu0 0
  %1015 = vmatpush1.bf16.msra.mxu0 %v528
  %1016 = vmatprep.subr.bf16.mxu0 0
  %1017 = vmatpush1.bf16.msra.mxu0 %v529
  %1018 = vmatprep.subr.bf16.mxu0 0
  %1019 = vmatpush1.bf16.msra.mxu0 %v530
  %1020 = vmatprep.subr.bf16.mxu0 0
  %1021 = vmatpush1.bf16.msra.mxu0 %v531
  %1022 = vmatprep.subr.bf16.mxu0 0
  %1023 = vmatpush1.bf16.msra.mxu0 %v532
  %1024 = vmatprep.subr.bf16.mxu0 0
  %1025 = vmatpush1.bf16.msra.mxu0 %v533
  %1026 = vmatprep.subr.bf16.mxu0 0
  %1027 = vmatpush1.bf16.msra.mxu0 %v534
  %1028 = vmatprep.subr.bf16.mxu0 0
  %1029 = vmatpush1.bf16.msra.mxu0 %v535
  %1030 = vmatprep.subr.bf16.mxu0 0
  %1031 = vmatpush1.bf16.msra.mxu0 %v536
  %1032 = vmatprep.subr.bf16.mxu0 0
  %1033 = vmatpush1.bf16.msra.mxu0 %v537
  %1034 = vmatprep.mubr.bf16.mxu0 %v881
  %1035 = vmatmul.mubr.bf16.gmra.mrb[0].mxu0 %v880
  %v1036 = vpop.f32.mrb[0].mxu0
  %v1037 = vadd.f32 %v997, %v1036
  %v1038 = vpop.f32.mrb[0].mxu0
  %v1039 = vpop.f32.mrb[0].mxu0
  %v1040 = vpop.f32.mrb[0].mxu0
  %1041 = vdwg.mxu0
  %v1042 = vmax.f32 %v1037, 0.0
  %v1043 = vpack.c.bf16 %v1042, %v1042
  %v1045 = vsel %vm782, %v1043, 0
  %1047 = vmatprep.subr.bf16.mxu0 0
  %1048 = vmatpush1.bf16.msra.mxu0 %v778
  %1049 = vmatprep.subr.bf16.mxu0 0
  %1050 = vmatpush1.bf16.msra.mxu0 %v779
  %1051 = vmatprep.subr.bf16.mxu0 0
  %1052 = vmatpush1.bf16.msra.mxu0 0
  %1053 = vmatprep.subr.bf16.mxu0 0
  %1054 = vmatpush1.bf16.msra.mxu0 0
  %1055 = vmatprep.subr.bf16.mxu0 0
  %1056 = vmatpush1.bf16.msra.mxu0 0
  %1057 = vmatprep.subr.bf16.mxu0 0
  %1058 = vmatpush1.bf16.msra.mxu0 0
  %1059 = vmatprep.subr.bf16.mxu0 0
  %1060 = vmatpush1.bf16.msra.mxu0 0
  %1061 = vmatprep.subr.bf16.mxu0 0
  %1062 = vmatpush1.bf16.msra.mxu0 0
  %1063 = vmatprep.subr.bf16.mxu0 0
  %1064 = vmatpush1.bf16.msra.mxu0 0
  %1065 = vmatprep.subr.bf16.mxu0 0
  %1066 = vmatpush1.bf16.msra.mxu0 0
  %1067 = vmatprep.subr.bf16.mxu0 0
  %1068 = vmatpush1.bf16.msra.mxu0 0
  %1069 = vmatprep.subr.bf16.mxu0 0
  %1070 = vmatpush1.bf16.msra.mxu0 0
  %1071 = vmatprep.subr.bf16.mxu0 0
  %1072 = vmatpush1.bf16.msra.mxu0 0
  %1073 = vmatprep.subr.bf16.mxu0 0
  %1074 = vmatpush1.bf16.msra.mxu0 0
  %1075 = vmatprep.subr.bf16.mxu0 0
  %1076 = vmatpush1.bf16.msra.mxu0 0
  %1077 = vmatprep.subr.bf16.mxu0 0
  %1078 = vmatpush1.bf16.msra.mxu0 0
  %1079 = vmatprep.mubr.bf16.mxu0 0
  %1080 = vmatmul.mubr.bf16.gmra.mrb[0].mxu0 %v1045
  %v1081 = vpop.f32.mrb[0].mxu0
  %v1082 = vadd.f32 %v768, %v1081
  %v1083 = vpop.f32.mrb[0].mxu0
  %v1084 = vpop.f32.mrb[0].mxu0
  %v1085 = vpop.f32.mrb[0].mxu0
  %1086 = vdwg.mxu0
  %v1087 = vpack.c.bf16 %v1082, %v1082
  %1088 = vst [vmem:[%s6 + $0x1] sm:$0x1] %v1087
  // Predicated region
  $region26: #{av_encoder_forward.3} parent=0 // pred_check
    _
  $region27: #{av_encoder_forward.3} parent=0 // pred_check_branch
    %1090 = sbr.rel (0) target = $region29
  $region28: #{av_encoder_forward.3} parent=0 // pred_region
    _
  $region29: #{av_encoder_forward.3} parent=0 // pred_fallthru
    _
  // Predicated region
  $region30: #{av_encoder_forward.3} parent=0 // pred_check
    _
  $region31: #{av_encoder_forward.3} parent=0 // pred_check_branch
    %1092 = sbr.rel (0) target = $region33
  $region32: #{av_encoder_forward.3} parent=0 // pred_region
    _
  $region33: #{av_encoder_forward.3} parent=0 // pred_fallthru
    _

</llo_original>
